<compile_context>
chip_gen: v5e
topology: v5e:2x2
jax: 0.10.0
libtpu: 0.0.40
codegen_flags: <defaults>
</compile_context>

<pallas_src>
import jax
import jax.numpy as jnp
from jax import lax
from jax.experimental import pallas as pl
from jax.experimental.pallas import tpu as pltpu

# Module-consistent small shapes.
N, NI, NF, L = 2, 4, 8, 128
KS = [9, 19, 39]                     # [10, 20, 40] odd-ified by the module
KMAX = max(KS)                       # 39
PMAX = (KMAX - 1) // 2               # 19 ('same' padding of the widest conv)
NROWS = NI * KMAX + NI               # 156 conv-window rows + 4 maxpool rows = 160
NC = 4 * NF                          # 32 output channels
NL = N * L                           # 256 lanes (batch stacked on the lane axis)
EPS = 1e-5

# bf16 inputs cut MXU passes ~3x on v5e/v6e/v7x; kept f32 here to preserve the
# strict 1e-3 check against the f32 reference.  Flip when scaling up shapes.
MATMUL_DTYPE = jnp.float32


def inception_kernel(x_ref, w_ref, gb_ref, out_ref, xcol_ref):
    # x_ref:    (N, NI, L)     raw input
    # w_ref:    (NC, NROWS)    block-stacked branch weights
    # gb_ref:   (NC, 2)        [gamma | beta]
    # out_ref:  (NC, N*L)      lane-dense output slab
    # xcol_ref: (NROWS, N*L)   VMEM scratch for the in-kernel im2col stack
    # Stack batch onto the lane axis: xz[i, n*L + t] = x[n, i, t] (128-aligned concat).
    xz = jnp.concatenate([x_ref[n] for n in range(N)], axis=1)        # (NI, NL)
    # Within-batch time position of every lane (L is a power of two).
    t_in = lax.broadcasted_iota(jnp.int32, (NI, NL), 1) % L

    def window(g):
        # im2col row-block g: x[n, i, t + g - PMAX], zero-padded at batch edges.
        s = g - PMAX
        if s == 0:
            return xz
        rolled = pltpu.roll(xz, (-s) % NL, 1)    # lane rotation (XLU), jnp.roll semantics
        mask = (t_in < L - s) if s > 0 else (t_in >= -s)
        return jnp.where(mask, rolled, 0.0)

    # Build the im2col stack in VMEM: 39 conv-window blocks, lane-dense stores.
    # NOTE(v5e): NROWS=160 means a second, mostly-empty 128-deep K pass on the
    # 128-wide MXU; acceptable at this size, repack if NI/K grow.
    for g in range(KMAX):
        xcol_ref[NI * g:NI * (g + 1), :] = window(g).astype(xcol_ref.dtype)

    # MaxPool1d(3, stride=1, padding=1): implicit -inf pad == clamp-to-self here.
    left = jnp.where(t_in > 0, pltpu.roll(xz, 1, 1), xz)
    right = jnp.where(t_in < L - 1, pltpu.roll(xz, NL - 1, 1), xz)
    mp = jnp.maximum(jnp.maximum(left, xz), right)
    xcol_ref[NI * KMAX:, :] = mp.astype(xcol_ref.dtype)

    # All four branches in a single MXU matmul: (NC, NROWS) @ (NROWS, N*L).
    y = jnp.dot(w_ref[...], xcol_ref[...], preferred_element_type=jnp.float32)

    # BatchNorm1d (training mode): per-channel stats over (batch, length),
    # centered two-pass variance, biased estimator.
    inv_cnt = 1.0 / float(NL)
    mean = jnp.sum(y, axis=1, keepdims=True) * inv_cnt                # (NC, 1)
    d = y - mean
    var = jnp.sum(d * d, axis=1, keepdims=True) * inv_cnt
    inv_std = lax.rsqrt(var + EPS)

    gamma = gb_ref[:, 0:1]
    beta = gb_ref[:, 1:2]
    scale = gamma * inv_std                                           # (NC, 1)
    shift = beta - mean * scale
    # Folded affine + ReLU; one lane-dense 256-lane output store.
    out_ref[...] = jnp.maximum(y * scale + shift, 0.0)


def _build_wbig(w9, w19, w39, wmp):
    """Zero-padded block-stack of the four branch weights -> (NC, NROWS).
    Parameter-only; runs once at setup, NOT in the per-call path."""
    def branch(wb, K):                                   # wb: (NF, NI, K) torch layout
        p = (K - 1) // 2
        g0 = PMAX - p                                    # first global tap this kernel uses
        blk = jnp.transpose(wb, (0, 2, 1)).reshape(NF, K * NI)        # col = k*NI + i
        return jnp.pad(blk, ((0, 0), (g0 * NI, NROWS - (g0 + K) * NI)))
    rows = [branch(w9, KS[0]), branch(w19, KS[1]), branch(w39, KS[2]),
            jnp.pad(wmp[:, :, 0], ((0, 0), (NI * KMAX, 0)))]          # maxpool 1x1 rows
    return jnp.concatenate(rows, axis=0)                              # (NC, NROWS)


def prepare_params(w9, w19, w39, wmp, gamma, beta):
    """One-time parameter preprocessing (hoisted out of the forward path)."""
    w_big = _build_wbig(w9, w19, w39, wmp).astype(MATMUL_DTYPE)
    gb = jnp.stack([gamma, beta], axis=1).astype(jnp.float32)         # (NC, 2)
    return w_big, gb


@jax.jit
def inception_forward(x, w_big, gb):
    """x: (N, NI, L) f32; w_big: (NC, NROWS); gb: (NC, 2). Returns (N, NC, L)."""
    flops = 2 * NC * NROWS * NL
    bytes_accessed = (x.size * x.dtype.itemsize
                      + w_big.size * w_big.dtype.itemsize
                      + gb.size * gb.dtype.itemsize
                      + NC * NL * 4)
    vmem = pl.BlockSpec(memory_space=pltpu.MemorySpace.VMEM)
    y = pl.pallas_call(
        inception_kernel,
        out_shape=jax.ShapeDtypeStruct((NC, NL), jnp.float32),
        in_specs=[vmem, vmem, vmem],
        out_specs=vmem,
        scratch_shapes=[pltpu.VMEM((NROWS, NL), MATMUL_DTYPE)],
        cost_estimate=pl.CostEstimate(flops=flops, transcendentals=0,
                                      bytes_accessed=bytes_accessed),
    )(x.astype(MATMUL_DTYPE), w_big, gb)
    # (NC, N*L) lane-dense slab -> (N, NC, L): cheap wrapper-side layout plumbing.
    return jnp.transpose(y.reshape(NC, N, L), (1, 0, 2))


def reference(x, w9, w19, w39, wmp, gamma, beta):
    """Pure-JAX reference (independent of the kernel's arithmetic)."""
    dn = ('NCH', 'OIH', 'NCH')
    outs = []
    for w, K in zip([w9, w19, w39], KS):
        p = (K - 1) // 2
        outs.append(lax.conv_general_dilated(
            x, w, (1,), [(p, p)], dimension_numbers=dn,
            precision=lax.Precision.HIGHEST))
    mp = lax.reduce_window(x, -jnp.inf, lax.max, (1, 1, 3), (1, 1, 1),
                           [(0, 0), (0, 0), (1, 1)])
    outs.append(lax.conv_general_dilated(
        mp, wmp, (1,), [(0, 0)], dimension_numbers=dn,
        precision=lax.Precision.HIGHEST))
    y = jnp.concatenate(outs, axis=1)                                 # (N, NC, L)
    mean = jnp.mean(y, axis=(0, 2), keepdims=True)
    var = jnp.mean((y - mean) ** 2, axis=(0, 2), keepdims=True)
    yhat = (y - mean) / jnp.sqrt(var + EPS)
    yhat = yhat * gamma.reshape(1, -1, 1) + beta.reshape(1, -1, 1)
    return jnp.maximum(yhat, 0.0)


if __name__ == "__main__":
    key = jax.random.PRNGKey(0)
    ks = jax.random.split(key, 5)
    x = jax.random.normal(ks[0], (N, NI, L), jnp.float32)
    # Conv weights in PyTorch layout (out_ch, in_ch, kernel); deterministic init.
    w9 = jax.random.normal(ks[1], (NF, NI, 9), jnp.float32) * 0.1
    w19 = jax.random.normal(ks[2], (NF, NI, 19), jnp.float32) * 0.1
    w39 = jax.random.normal(ks[3], (NF, NI, 39), jnp.float32) * 0.1
    wmp = jax.random.normal(ks[4], (NF, NI, 1), jnp.float32) * 0.1
    # BatchNorm1d default init: weight = 1, bias = 0.
    gamma = jnp.ones((NC,), jnp.float32)
    beta = jnp.zeros((NC,), jnp.float32)

    # One-time parameter preprocessing (outside the per-call path).
    w_big, gb = prepare_params(w9, w19, w39, wmp, gamma, beta)

    out = inception_forward(x, w_big, gb)
    jax.block_until_ready(out)

    ref = reference(x, w9, w19, w39, wmp, gamma, beta)
    assert out.shape == (N, NC, L)
    err = float(jnp.max(jnp.abs(out - ref)))
    assert jnp.allclose(out, ref, atol=1e-3, rtol=1e-3), err
    print("KERNEL_OK")
</pallas_src>

<mosaic_0001>
module attributes {stable_mosaic.version = 11 : i64} {
  func.func @inception_kernel(%arg0: memref<2x4x128xf32, #tpu.memory_space<vmem>>, %arg1: memref<32x160xf32, #tpu.memory_space<vmem>>, %arg2: memref<32x2xf32, #tpu.memory_space<vmem>>, %arg3: memref<32x256xf32, #tpu.memory_space<vmem>>, %arg4: memref<160x256xf32, #tpu.memory_space<vmem>>) attributes {dimension_semantics = [], scalar_prefetch = 0 : i64, scratch_operands = 1 : i64, tpu.core_type = #tpu.core_type<tc>} {
    %c0 = arith.constant 0 : index
    %c0_0 = arith.constant 0 : index
    %c0_1 = arith.constant 0 : index
    %0 = vector.load %arg0[%c0, %c0_0, %c0_1] : memref<2x4x128xf32, #tpu.memory_space<vmem>>, vector<1x4x128xf32>
    %1 = vector.shape_cast %0 : vector<1x4x128xf32> to vector<4x128xf32>
    %c1 = arith.constant 1 : index
    %c0_2 = arith.constant 0 : index
    %c0_3 = arith.constant 0 : index
    %2 = vector.load %arg0[%c1, %c0_2, %c0_3] : memref<2x4x128xf32, #tpu.memory_space<vmem>>, vector<1x4x128xf32>
    %3 = vector.shape_cast %2 : vector<1x4x128xf32> to vector<4x128xf32>
    %4 = tpu.concatenate %1, %3 in 1 : vector<4x128xf32>, vector<4x128xf32> -> vector<4x256xf32>
    %5 = tpu.iota {dimensions = array<i32: 1>} : vector<4x256xi32>
    %c128_i32 = arith.constant 128 : i32
    %c0_i32 = arith.constant 0 : i32
    %6 = arith.cmpi eq, %c128_i32, %c0_i32 : i32
    %c1_i32 = arith.constant 1 : i32
    %7 = arith.select %6, %c1_i32, %c128_i32 : i32
    %8 = vector.broadcast %7 : i32 to vector<4x256xi32>
    %9 = arith.remsi %5, %8 : vector<4x256xi32>
    %c0_i32_4 = arith.constant 0 : i32
    %10 = vector.broadcast %c0_i32_4 : i32 to vector<4x256xi32>
    %11 = arith.cmpi ne, %9, %10 : vector<4x256xi32>
    %c0_i32_5 = arith.constant 0 : i32
    %12 = vector.broadcast %c0_i32_5 : i32 to vector<4x256xi32>
    %13 = arith.cmpi slt, %9, %12 : vector<4x256xi32>
    %c0_i32_6 = arith.constant 0 : i32
    %14 = arith.cmpi slt, %7, %c0_i32_6 : i32
    %15 = vector.broadcast %14 : i1 to vector<4x256xi1>
    %16 = vector.broadcast %15 : vector<4x256xi1> to vector<4x256xi1>
    %17 = arith.xori %13, %16 : vector<4x256xi1>
    %18 = arith.andi %17, %11 : vector<4x256xi1>
    %19 = vector.broadcast %7 : i32 to vector<4x256xi32>
    %20 = arith.addi %9, %19 : vector<4x256xi32>
    %21 = arith.select %18, %20, %9 : vector<4x256xi1>, vector<4x256xi32>
    %c19_i32 = arith.constant 19 : i32
    %22 = tpu.dynamic_rotate %4 by %c19_i32 dim 1 : vector<4x256xf32>, i32 -> vector<4x256xf32>
    %c19_i32_7 = arith.constant 19 : i32
    %23 = vector.broadcast %c19_i32_7 : i32 to vector<4x256xi32>
    %24 = arith.cmpi sge, %21, %23 : vector<4x256xi32>
    %cst = arith.constant 0.000000e+00 : f32
    %25 = vector.broadcast %cst : f32 to vector<4x256xf32>
    %26 = arith.select %24, %22, %25 : vector<4x256xi1>, vector<4x256xf32>
    %c0_8 = arith.constant 0 : index
    %c0_9 = arith.constant 0 : index
    %27 = vector.load %arg4[%c0_8, %c0_9] : memref<160x256xf32, #tpu.memory_space<vmem>>, vector<4x256xf32>
    tpu.vector_store %arg4[%c0_8, %c0_9], %26 {strides = array<i32>} : memref<160x256xf32, #tpu.memory_space<vmem>>, vector<4x256xf32>,
    %c18_i32 = arith.constant 18 : i32
    %28 = tpu.dynamic_rotate %4 by %c18_i32 dim 1 : vector<4x256xf32>, i32 -> vector<4x256xf32>
    %c18_i32_10 = arith.constant 18 : i32
    %29 = vector.broadcast %c18_i32_10 : i32 to vector<4x256xi32>
    %30 = arith.cmpi sge, %21, %29 : vector<4x256xi32>
    %cst_11 = arith.constant 0.000000e+00 : f32
    %31 = vector.broadcast %cst_11 : f32 to vector<4x256xf32>
    %32 = arith.select %30, %28, %31 : vector<4x256xi1>, vector<4x256xf32>
    %c4 = arith.constant 4 : index
    %c0_12 = arith.constant 0 : index
    %33 = vector.load %arg4[%c4, %c0_12] : memref<160x256xf32, #tpu.memory_space<vmem>>, vector<4x256xf32>
    tpu.vector_store %arg4[%c4, %c0_12], %32 {strides = array<i32>} : memref<160x256xf32, #tpu.memory_space<vmem>>, vector<4x256xf32>,
    %c17_i32 = arith.constant 17 : i32
    %34 = tpu.dynamic_rotate %4 by %c17_i32 dim 1 : vector<4x256xf32>, i32 -> vector<4x256xf32>
    %c17_i32_13 = arith.constant 17 : i32
    %35 = vector.broadcast %c17_i32_13 : i32 to vector<4x256xi32>
    %36 = arith.cmpi sge, %21, %35 : vector<4x256xi32>
    %cst_14 = arith.constant 0.000000e+00 : f32
    %37 = vector.broadcast %cst_14 : f32 to vector<4x256xf32>
    %38 = arith.select %36, %34, %37 : vector<4x256xi1>, vector<4x256xf32>
    %c8 = arith.constant 8 : index
    %c0_15 = arith.constant 0 : index
    %39 = vector.load %arg4[%c8, %c0_15] : memref<160x256xf32, #tpu.memory_space<vmem>>, vector<4x256xf32>
    tpu.vector_store %arg4[%c8, %c0_15], %38 {strides = array<i32>} : memref<160x256xf32, #tpu.memory_space<vmem>>, vector<4x256xf32>,
    %c16_i32 = arith.constant 16 : i32
    %40 = tpu.dynamic_rotate %4 by %c16_i32 dim 1 : vector<4x256xf32>, i32 -> vector<4x256xf32>
    %c16_i32_16 = arith.constant 16 : i32
    %41 = vector.broadcast %c16_i32_16 : i32 to vector<4x256xi32>
    %42 = arith.cmpi sge, %21, %41 : vector<4x256xi32>
    %cst_17 = arith.constant 0.000000e+00 : f32
    %43 = vector.broadcast %cst_17 : f32 to vector<4x256xf32>
    %44 = arith.select %42, %40, %43 : vector<4x256xi1>, vector<4x256xf32>
    %c12 = arith.constant 12 : index
    %c0_18 = arith.constant 0 : index
    %45 = vector.load %arg4[%c12, %c0_18] : memref<160x256xf32, #tpu.memory_space<vmem>>, vector<4x256xf32>
    tpu.vector_store %arg4[%c12, %c0_18], %44 {strides = array<i32>} : memref<160x256xf32, #tpu.memory_space<vmem>>, vector<4x256xf32>,
    %c15_i32 = arith.constant 15 : i32
    %46 = tpu.dynamic_rotate %4 by %c15_i32 dim 1 : vector<4x256xf32>, i32 -> vector<4x256xf32>
    %c15_i32_19 = arith.constant 15 : i32
    %47 = vector.broadcast %c15_i32_19 : i32 to vector<4x256xi32>
    %48 = arith.cmpi sge, %21, %47 : vector<4x256xi32>
    %cst_20 = arith.constant 0.000000e+00 : f32
    %49 = vector.broadcast %cst_20 : f32 to vector<4x256xf32>
    %50 = arith.select %48, %46, %49 : vector<4x256xi1>, vector<4x256xf32>
    %c16 = arith.constant 16 : index
    %c0_21 = arith.constant 0 : index
    %51 = vector.load %arg4[%c16, %c0_21] : memref<160x256xf32, #tpu.memory_space<vmem>>, vector<4x256xf32>
    tpu.vector_store %arg4[%c16, %c0_21], %50 {strides = array<i32>} : memref<160x256xf32, #tpu.memory_space<vmem>>, vector<4x256xf32>,
    %c14_i32 = arith.constant 14 : i32
    %52 = tpu.dynamic_rotate %4 by %c14_i32 dim 1 : vector<4x256xf32>, i32 -> vector<4x256xf32>
    %c14_i32_22 = arith.constant 14 : i32
    %53 = vector.broadcast %c14_i32_22 : i32 to vector<4x256xi32>
    %54 = arith.cmpi sge, %21, %53 : vector<4x256xi32>
    %cst_23 = arith.constant 0.000000e+00 : f32
    %55 = vector.broadcast %cst_23 : f32 to vector<4x256xf32>
    %56 = arith.select %54, %52, %55 : vector<4x256xi1>, vector<4x256xf32>
    %c20 = arith.constant 20 : index
    %c0_24 = arith.constant 0 : index
    %57 = vector.load %arg4[%c20, %c0_24] : memref<160x256xf32, #tpu.memory_space<vmem>>, vector<4x256xf32>
    tpu.vector_store %arg4[%c20, %c0_24], %56 {strides = array<i32>} : memref<160x256xf32, #tpu.memory_space<vmem>>, vector<4x256xf32>,
    %c13_i32 = arith.constant 13 : i32
    %58 = tpu.dynamic_rotate %4 by %c13_i32 dim 1 : vector<4x256xf32>, i32 -> vector<4x256xf32>
    %c13_i32_25 = arith.constant 13 : i32
    %59 = vector.broadcast %c13_i32_25 : i32 to vector<4x256xi32>
    %60 = arith.cmpi sge, %21, %59 : vector<4x256xi32>
    %cst_26 = arith.constant 0.000000e+00 : f32
    %61 = vector.broadcast %cst_26 : f32 to vector<4x256xf32>
    %62 = arith.select %60, %58, %61 : vector<4x256xi1>, vector<4x256xf32>
    %c24 = arith.constant 24 : index
    %c0_27 = arith.constant 0 : index
    %63 = vector.load %arg4[%c24, %c0_27] : memref<160x256xf32, #tpu.memory_space<vmem>>, vector<4x256xf32>
    tpu.vector_store %arg4[%c24, %c0_27], %62 {strides = array<i32>} : memref<160x256xf32, #tpu.memory_space<vmem>>, vector<4x256xf32>,
    %c12_i32 = arith.constant 12 : i32
    %64 = tpu.dynamic_rotate %4 by %c12_i32 dim 1 : vector<4x256xf32>, i32 -> vector<4x256xf32>
    %c12_i32_28 = arith.constant 12 : i32
    %65 = vector.broadcast %c12_i32_28 : i32 to vector<4x256xi32>
    %66 = arith.cmpi sge, %21, %65 : vector<4x256xi32>
    %cst_29 = arith.constant 0.000000e+00 : f32
    %67 = vector.broadcast %cst_29 : f32 to vector<4x256xf32>
    %68 = arith.select %66, %64, %67 : vector<4x256xi1>, vector<4x256xf32>
    %c28 = arith.constant 28 : index
    %c0_30 = arith.constant 0 : index
    %69 = vector.load %arg4[%c28, %c0_30] : memref<160x256xf32, #tpu.memory_space<vmem>>, vector<4x256xf32>
    tpu.vector_store %arg4[%c28, %c0_30], %68 {strides = array<i32>} : memref<160x256xf32, #tpu.memory_space<vmem>>, vector<4x256xf32>,
    %c11_i32 = arith.constant 11 : i32
    %70 = tpu.dynamic_rotate %4 by %c11_i32 dim 1 : vector<4x256xf32>, i32 -> vector<4x256xf32>
    %c11_i32_31 = arith.constant 11 : i32
    %71 = vector.broadcast %c11_i32_31 : i32 to vector<4x256xi32>
    %72 = arith.cmpi sge, %21, %71 : vector<4x256xi32>
    %cst_32 = arith.constant 0.000000e+00 : f32
    %73 = vector.broadcast %cst_32 : f32 to vector<4x256xf32>
    %74 = arith.select %72, %70, %73 : vector<4x256xi1>, vector<4x256xf32>
    %c32 = arith.constant 32 : index
    %c0_33 = arith.constant 0 : index
    %75 = vector.load %arg4[%c32, %c0_33] : memref<160x256xf32, #tpu.memory_space<vmem>>, vector<4x256xf32>
    tpu.vector_store %arg4[%c32, %c0_33], %74 {strides = array<i32>} : memref<160x256xf32, #tpu.memory_space<vmem>>, vector<4x256xf32>,
    %c10_i32 = arith.constant 10 : i32
    %76 = tpu.dynamic_rotate %4 by %c10_i32 dim 1 : vector<4x256xf32>, i32 -> vector<4x256xf32>
    %c10_i32_34 = arith.constant 10 : i32
    %77 = vector.broadcast %c10_i32_34 : i32 to vector<4x256xi32>
    %78 = arith.cmpi sge, %21, %77 : vector<4x256xi32>
    %cst_35 = arith.constant 0.000000e+00 : f32
    %79 = vector.broadcast %cst_35 : f32 to vector<4x256xf32>
    %80 = arith.select %78, %76, %79 : vector<4x256xi1>, vector<4x256xf32>
    %c36 = arith.constant 36 : index
    %c0_36 = arith.constant 0 : index
    %81 = vector.load %arg4[%c36, %c0_36] : memref<160x256xf32, #tpu.memory_space<vmem>>, vector<4x256xf32>
    tpu.vector_store %arg4[%c36, %c0_36], %80 {strides = array<i32>} : memref<160x256xf32, #tpu.memory_space<vmem>>, vector<4x256xf32>,
    %c9_i32 = arith.constant 9 : i32
    %82 = tpu.dynamic_rotate %4 by %c9_i32 dim 1 : vector<4x256xf32>, i32 -> vector<4x256xf32>
    %c9_i32_37 = arith.constant 9 : i32
    %83 = vector.broadcast %c9_i32_37 : i32 to vector<4x256xi32>
    %84 = arith.cmpi sge, %21, %83 : vector<4x256xi32>
    %cst_38 = arith.constant 0.000000e+00 : f32
    %85 = vector.broadcast %cst_38 : f32 to vector<4x256xf32>
    %86 = arith.select %84, %82, %85 : vector<4x256xi1>, vector<4x256xf32>
    %c40 = arith.constant 40 : index
    %c0_39 = arith.constant 0 : index
    %87 = vector.load %arg4[%c40, %c0_39] : memref<160x256xf32, #tpu.memory_space<vmem>>, vector<4x256xf32>
    tpu.vector_store %arg4[%c40, %c0_39], %86 {strides = array<i32>} : memref<160x256xf32, #tpu.memory_space<vmem>>, vector<4x256xf32>,
    %c8_i32 = arith.constant 8 : i32
    %88 = tpu.dynamic_rotate %4 by %c8_i32 dim 1 : vector<4x256xf32>, i32 -> vector<4x256xf32>
    %c8_i32_40 = arith.constant 8 : i32
    %89 = vector.broadcast %c8_i32_40 : i32 to vector<4x256xi32>
    %90 = arith.cmpi sge, %21, %89 : vector<4x256xi32>
    %cst_41 = arith.constant 0.000000e+00 : f32
    %91 = vector.broadcast %cst_41 : f32 to vector<4x256xf32>
    %92 = arith.select %90, %88, %91 : vector<4x256xi1>, vector<4x256xf32>
    %c44 = arith.constant 44 : index
    %c0_42 = arith.constant 0 : index
    %93 = vector.load %arg4[%c44, %c0_42] : memref<160x256xf32, #tpu.memory_space<vmem>>, vector<4x256xf32>
    tpu.vector_store %arg4[%c44, %c0_42], %92 {strides = array<i32>} : memref<160x256xf32, #tpu.memory_space<vmem>>, vector<4x256xf32>,
    %c7_i32 = arith.constant 7 : i32
    %94 = tpu.dynamic_rotate %4 by %c7_i32 dim 1 : vector<4x256xf32>, i32 -> vector<4x256xf32>
    %c7_i32_43 = arith.constant 7 : i32
    %95 = vector.broadcast %c7_i32_43 : i32 to vector<4x256xi32>
    %96 = arith.cmpi sge, %21, %95 : vector<4x256xi32>
    %cst_44 = arith.constant 0.000000e+00 : f32
    %97 = vector.broadcast %cst_44 : f32 to vector<4x256xf32>
    %98 = arith.select %96, %94, %97 : vector<4x256xi1>, vector<4x256xf32>
    %c48 = arith.constant 48 : index
    %c0_45 = arith.constant 0 : index
    %99 = vector.load %arg4[%c48, %c0_45] : memref<160x256xf32, #tpu.memory_space<vmem>>, vector<4x256xf32>
    tpu.vector_store %arg4[%c48, %c0_45], %98 {strides = array<i32>} : memref<160x256xf32, #tpu.memory_space<vmem>>, vector<4x256xf32>,
    %c6_i32 = arith.constant 6 : i32
    %100 = tpu.dynamic_rotate %4 by %c6_i32 dim 1 : vector<4x256xf32>, i32 -> vector<4x256xf32>
    %c6_i32_46 = arith.constant 6 : i32
    %101 = vector.broadcast %c6_i32_46 : i32 to vector<4x256xi32>
    %102 = arith.cmpi sge, %21, %101 : vector<4x256xi32>
    %cst_47 = arith.constant 0.000000e+00 : f32
    %103 = vector.broadcast %cst_47 : f32 to vector<4x256xf32>
    %104 = arith.select %102, %100, %103 : vector<4x256xi1>, vector<4x256xf32>
    %c52 = arith.constant 52 : index
    %c0_48 = arith.constant 0 : index
    %105 = vector.load %arg4[%c52, %c0_48] : memref<160x256xf32, #tpu.memory_space<vmem>>, vector<4x256xf32>
    tpu.vector_store %arg4[%c52, %c0_48], %104 {strides = array<i32>} : memref<160x256xf32, #tpu.memory_space<vmem>>, vector<4x256xf32>,
    %c5_i32 = arith.constant 5 : i32
    %106 = tpu.dynamic_rotate %4 by %c5_i32 dim 1 : vector<4x256xf32>, i32 -> vector<4x256xf32>
    %c5_i32_49 = arith.constant 5 : i32
    %107 = vector.broadcast %c5_i32_49 : i32 to vector<4x256xi32>
    %108 = arith.cmpi sge, %21, %107 : vector<4x256xi32>
    %cst_50 = arith.constant 0.000000e+00 : f32
    %109 = vector.broadcast %cst_50 : f32 to vector<4x256xf32>
    %110 = arith.select %108, %106, %109 : vector<4x256xi1>, vector<4x256xf32>
    %c56 = arith.constant 56 : index
    %c0_51 = arith.constant 0 : index
    %111 = vector.load %arg4[%c56, %c0_51] : memref<160x256xf32, #tpu.memory_space<vmem>>, vector<4x256xf32>
    tpu.vector_store %arg4[%c56, %c0_51], %110 {strides = array<i32>} : memref<160x256xf32, #tpu.memory_space<vmem>>, vector<4x256xf32>,
    %c4_i32 = arith.constant 4 : i32
    %112 = tpu.dynamic_rotate %4 by %c4_i32 dim 1 : vector<4x256xf32>, i32 -> vector<4x256xf32>
    %c4_i32_52 = arith.constant 4 : i32
    %113 = vector.broadcast %c4_i32_52 : i32 to vector<4x256xi32>
    %114 = arith.cmpi sge, %21, %113 : vector<4x256xi32>
    %cst_53 = arith.constant 0.000000e+00 : f32
    %115 = vector.broadcast %cst_53 : f32 to vector<4x256xf32>
    %116 = arith.select %114, %112, %115 : vector<4x256xi1>, vector<4x256xf32>
    %c60 = arith.constant 60 : index
    %c0_54 = arith.constant 0 : index
    %117 = vector.load %arg4[%c60, %c0_54] : memref<160x256xf32, #tpu.memory_space<vmem>>, vector<4x256xf32>
    tpu.vector_store %arg4[%c60, %c0_54], %116 {strides = array<i32>} : memref<160x256xf32, #tpu.memory_space<vmem>>, vector<4x256xf32>,
    %c3_i32 = arith.constant 3 : i32
    %118 = tpu.dynamic_rotate %4 by %c3_i32 dim 1 : vector<4x256xf32>, i32 -> vector<4x256xf32>
    %c3_i32_55 = arith.constant 3 : i32
    %119 = vector.broadcast %c3_i32_55 : i32 to vector<4x256xi32>
    %120 = arith.cmpi sge, %21, %119 : vector<4x256xi32>
    %cst_56 = arith.constant 0.000000e+00 : f32
    %121 = vector.broadcast %cst_56 : f32 to vector<4x256xf32>
    %122 = arith.select %120, %118, %121 : vector<4x256xi1>, vector<4x256xf32>
    %c64 = arith.constant 64 : index
    %c0_57 = arith.constant 0 : index
    %123 = vector.load %arg4[%c64, %c0_57] : memref<160x256xf32, #tpu.memory_space<vmem>>, vector<4x256xf32>
    tpu.vector_store %arg4[%c64, %c0_57], %122 {strides = array<i32>} : memref<160x256xf32, #tpu.memory_space<vmem>>, vector<4x256xf32>,
    %c2_i32 = arith.constant 2 : i32
    %124 = tpu.dynamic_rotate %4 by %c2_i32 dim 1 : vector<4x256xf32>, i32 -> vector<4x256xf32>
    %c2_i32_58 = arith.constant 2 : i32
    %125 = vector.broadcast %c2_i32_58 : i32 to vector<4x256xi32>
    %126 = arith.cmpi sge, %21, %125 : vector<4x256xi32>
    %cst_59 = arith.constant 0.000000e+00 : f32
    %127 = vector.broadcast %cst_59 : f32 to vector<4x256xf32>
    %128 = arith.select %126, %124, %127 : vector<4x256xi1>, vector<4x256xf32>
    %c68 = arith.constant 68 : index
    %c0_60 = arith.constant 0 : index
    %129 = vector.load %arg4[%c68, %c0_60] : memref<160x256xf32, #tpu.memory_space<vmem>>, vector<4x256xf32>
    tpu.vector_store %arg4[%c68, %c0_60], %128 {strides = array<i32>} : memref<160x256xf32, #tpu.memory_space<vmem>>, vector<4x256xf32>,
    %c1_i32_61 = arith.constant 1 : i32
    %130 = tpu.dynamic_rotate %4 by %c1_i32_61 dim 1 : vector<4x256xf32>, i32 -> vector<4x256xf32>
    %c1_i32_62 = arith.constant 1 : i32
    %131 = vector.broadcast %c1_i32_62 : i32 to vector<4x256xi32>
    %132 = arith.cmpi sge, %21, %131 : vector<4x256xi32>
    %cst_63 = arith.constant 0.000000e+00 : f32
    %133 = vector.broadcast %cst_63 : f32 to vector<4x256xf32>
    %134 = arith.select %132, %130, %133 : vector<4x256xi1>, vector<4x256xf32>
    %c72 = arith.constant 72 : index
    %c0_64 = arith.constant 0 : index
    %135 = vector.load %arg4[%c72, %c0_64] : memref<160x256xf32, #tpu.memory_space<vmem>>, vector<4x256xf32>
    tpu.vector_store %arg4[%c72, %c0_64], %134 {strides = array<i32>} : memref<160x256xf32, #tpu.memory_space<vmem>>, vector<4x256xf32>,
    %c76 = arith.constant 76 : index
    %c0_65 = arith.constant 0 : index
    %136 = vector.load %arg4[%c76, %c0_65] : memref<160x256xf32, #tpu.memory_space<vmem>>, vector<4x256xf32>
    tpu.vector_store %arg4[%c76, %c0_65], %4 {strides = array<i32>} : memref<160x256xf32, #tpu.memory_space<vmem>>, vector<4x256xf32>,
    %c255_i32 = arith.constant 255 : i32
    %137 = tpu.dynamic_rotate %4 by %c255_i32 dim 1 : vector<4x256xf32>, i32 -> vector<4x256xf32>
    %c127_i32 = arith.constant 127 : i32
    %138 = vector.broadcast %c127_i32 : i32 to vector<4x256xi32>
    %139 = arith.cmpi slt, %21, %138 : vector<4x256xi32>
    %cst_66 = arith.constant 0.000000e+00 : f32
    %140 = vector.broadcast %cst_66 : f32 to vector<4x256xf32>
    %141 = arith.select %139, %137, %140 : vector<4x256xi1>, vector<4x256xf32>
    %c80 = arith.constant 80 : index
    %c0_67 = arith.constant 0 : index
    %142 = vector.load %arg4[%c80, %c0_67] : memref<160x256xf32, #tpu.memory_space<vmem>>, vector<4x256xf32>
    tpu.vector_store %arg4[%c80, %c0_67], %141 {strides = array<i32>} : memref<160x256xf32, #tpu.memory_space<vmem>>, vector<4x256xf32>,
    %c254_i32 = arith.constant 254 : i32
    %143 = tpu.dynamic_rotate %4 by %c254_i32 dim 1 : vector<4x256xf32>, i32 -> vector<4x256xf32>
    %c126_i32 = arith.constant 126 : i32
    %144 = vector.broadcast %c126_i32 : i32 to vector<4x256xi32>
    %145 = arith.cmpi slt, %21, %144 : vector<4x256xi32>
    %cst_68 = arith.constant 0.000000e+00 : f32
    %146 = vector.broadcast %cst_68 : f32 to vector<4x256xf32>
    %147 = arith.select %145, %143, %146 : vector<4x256xi1>, vector<4x256xf32>
    %c84 = arith.constant 84 : index
    %c0_69 = arith.constant 0 : index
    %148 = vector.load %arg4[%c84, %c0_69] : memref<160x256xf32, #tpu.memory_space<vmem>>, vector<4x256xf32>
    tpu.vector_store %arg4[%c84, %c0_69], %147 {strides = array<i32>} : memref<160x256xf32, #tpu.memory_space<vmem>>, vector<4x256xf32>,
    %c253_i32 = arith.constant 253 : i32
    %149 = tpu.dynamic_rotate %4 by %c253_i32 dim 1 : vector<4x256xf32>, i32 -> vector<4x256xf32>
    %c125_i32 = arith.constant 125 : i32
    %150 = vector.broadcast %c125_i32 : i32 to vector<4x256xi32>
    %151 = arith.cmpi slt, %21, %150 : vector<4x256xi32>
    %cst_70 = arith.constant 0.000000e+00 : f32
    %152 = vector.broadcast %cst_70 : f32 to vector<4x256xf32>
    %153 = arith.select %151, %149, %152 : vector<4x256xi1>, vector<4x256xf32>
    %c88 = arith.constant 88 : index
    %c0_71 = arith.constant 0 : index
    %154 = vector.load %arg4[%c88, %c0_71] : memref<160x256xf32, #tpu.memory_space<vmem>>, vector<4x256xf32>
    tpu.vector_store %arg4[%c88, %c0_71], %153 {strides = array<i32>} : memref<160x256xf32, #tpu.memory_space<vmem>>, vector<4x256xf32>,
    %c252_i32 = arith.constant 252 : i32
    %155 = tpu.dynamic_rotate %4 by %c252_i32 dim 1 : vector<4x256xf32>, i32 -> vector<4x256xf32>
    %c124_i32 = arith.constant 124 : i32
    %156 = vector.broadcast %c124_i32 : i32 to vector<4x256xi32>
    %157 = arith.cmpi slt, %21, %156 : vector<4x256xi32>
    %cst_72 = arith.constant 0.000000e+00 : f32
    %158 = vector.broadcast %cst_72 : f32 to vector<4x256xf32>
    %159 = arith.select %157, %155, %158 : vector<4x256xi1>, vector<4x256xf32>
    %c92 = arith.constant 92 : index
    %c0_73 = arith.constant 0 : index
    %160 = vector.load %arg4[%c92, %c0_73] : memref<160x256xf32, #tpu.memory_space<vmem>>, vector<4x256xf32>
    tpu.vector_store %arg4[%c92, %c0_73], %159 {strides = array<i32>} : memref<160x256xf32, #tpu.memory_space<vmem>>, vector<4x256xf32>,
    %c251_i32 = arith.constant 251 : i32
    %161 = tpu.dynamic_rotate %4 by %c251_i32 dim 1 : vector<4x256xf32>, i32 -> vector<4x256xf32>
    %c123_i32 = arith.constant 123 : i32
    %162 = vector.broadcast %c123_i32 : i32 to vector<4x256xi32>
    %163 = arith.cmpi slt, %21, %162 : vector<4x256xi32>
    %cst_74 = arith.constant 0.000000e+00 : f32
    %164 = vector.broadcast %cst_74 : f32 to vector<4x256xf32>
    %165 = arith.select %163, %161, %164 : vector<4x256xi1>, vector<4x256xf32>
    %c96 = arith.constant 96 : index
    %c0_75 = arith.constant 0 : index
    %166 = vector.load %arg4[%c96, %c0_75] : memref<160x256xf32, #tpu.memory_space<vmem>>, vector<4x256xf32>
    tpu.vector_store %arg4[%c96, %c0_75], %165 {strides = array<i32>} : memref<160x256xf32, #tpu.memory_space<vmem>>, vector<4x256xf32>,
    %c250_i32 = arith.constant 250 : i32
    %167 = tpu.dynamic_rotate %4 by %c250_i32 dim 1 : vector<4x256xf32>, i32 -> vector<4x256xf32>
    %c122_i32 = arith.constant 122 : i32
    %168 = vector.broadcast %c122_i32 : i32 to vector<4x256xi32>
    %169 = arith.cmpi slt, %21, %168 : vector<4x256xi32>
    %cst_76 = arith.constant 0.000000e+00 : f32
    %170 = vector.broadcast %cst_76 : f32 to vector<4x256xf32>
    %171 = arith.select %169, %167, %170 : vector<4x256xi1>, vector<4x256xf32>
    %c100 = arith.constant 100 : index
    %c0_77 = arith.constant 0 : index
    %172 = vector.load %arg4[%c100, %c0_77] : memref<160x256xf32, #tpu.memory_space<vmem>>, vector<4x256xf32>
    tpu.vector_store %arg4[%c100, %c0_77], %171 {strides = array<i32>} : memref<160x256xf32, #tpu.memory_space<vmem>>, vector<4x256xf32>,
    %c249_i32 = arith.constant 249 : i32
    %173 = tpu.dynamic_rotate %4 by %c249_i32 dim 1 : vector<4x256xf32>, i32 -> vector<4x256xf32>
    %c121_i32 = arith.constant 121 : i32
    %174 = vector.broadcast %c121_i32 : i32 to vector<4x256xi32>
    %175 = arith.cmpi slt, %21, %174 : vector<4x256xi32>
    %cst_78 = arith.constant 0.000000e+00 : f32
    %176 = vector.broadcast %cst_78 : f32 to vector<4x256xf32>
    %177 = arith.select %175, %173, %176 : vector<4x256xi1>, vector<4x256xf32>
    %c104 = arith.constant 104 : index
    %c0_79 = arith.constant 0 : index
    %178 = vector.load %arg4[%c104, %c0_79] : memref<160x256xf32, #tpu.memory_space<vmem>>, vector<4x256xf32>
    tpu.vector_store %arg4[%c104, %c0_79], %177 {strides = array<i32>} : memref<160x256xf32, #tpu.memory_space<vmem>>, vector<4x256xf32>,
    %c248_i32 = arith.constant 248 : i32
    %179 = tpu.dynamic_rotate %4 by %c248_i32 dim 1 : vector<4x256xf32>, i32 -> vector<4x256xf32>
    %c120_i32 = arith.constant 120 : i32
    %180 = vector.broadcast %c120_i32 : i32 to vector<4x256xi32>
    %181 = arith.cmpi slt, %21, %180 : vector<4x256xi32>
    %cst_80 = arith.constant 0.000000e+00 : f32
    %182 = vector.broadcast %cst_80 : f32 to vector<4x256xf32>
    %183 = arith.select %181, %179, %182 : vector<4x256xi1>, vector<4x256xf32>
    %c108 = arith.constant 108 : index
    %c0_81 = arith.constant 0 : index
    %184 = vector.load %arg4[%c108, %c0_81] : memref<160x256xf32, #tpu.memory_space<vmem>>, vector<4x256xf32>
    tpu.vector_store %arg4[%c108, %c0_81], %183 {strides = array<i32>} : memref<160x256xf32, #tpu.memory_space<vmem>>, vector<4x256xf32>,
    %c247_i32 = arith.constant 247 : i32
    %185 = tpu.dynamic_rotate %4 by %c247_i32 dim 1 : vector<4x256xf32>, i32 -> vector<4x256xf32>
    %c119_i32 = arith.constant 119 : i32
    %186 = vector.broadcast %c119_i32 : i32 to vector<4x256xi32>
    %187 = arith.cmpi slt, %21, %186 : vector<4x256xi32>
    %cst_82 = arith.constant 0.000000e+00 : f32
    %188 = vector.broadcast %cst_82 : f32 to vector<4x256xf32>
    %189 = arith.select %187, %185, %188 : vector<4x256xi1>, vector<4x256xf32>
    %c112 = arith.constant 112 : index
    %c0_83 = arith.constant 0 : index
    %190 = vector.load %arg4[%c112, %c0_83] : memref<160x256xf32, #tpu.memory_space<vmem>>, vector<4x256xf32>
    tpu.vector_store %arg4[%c112, %c0_83], %189 {strides = array<i32>} : memref<160x256xf32, #tpu.memory_space<vmem>>, vector<4x256xf32>,
    %c246_i32 = arith.constant 246 : i32
    %191 = tpu.dynamic_rotate %4 by %c246_i32 dim 1 : vector<4x256xf32>, i32 -> vector<4x256xf32>
    %c118_i32 = arith.constant 118 : i32
    %192 = vector.broadcast %c118_i32 : i32 to vector<4x256xi32>
    %193 = arith.cmpi slt, %21, %192 : vector<4x256xi32>
    %cst_84 = arith.constant 0.000000e+00 : f32
    %194 = vector.broadcast %cst_84 : f32 to vector<4x256xf32>
    %195 = arith.select %193, %191, %194 : vector<4x256xi1>, vector<4x256xf32>
    %c116 = arith.constant 116 : index
    %c0_85 = arith.constant 0 : index
    %196 = vector.load %arg4[%c116, %c0_85] : memref<160x256xf32, #tpu.memory_space<vmem>>, vector<4x256xf32>
    tpu.vector_store %arg4[%c116, %c0_85], %195 {strides = array<i32>} : memref<160x256xf32, #tpu.memory_space<vmem>>, vector<4x256xf32>,
    %c245_i32 = arith.constant 245 : i32
    %197 = tpu.dynamic_rotate %4 by %c245_i32 dim 1 : vector<4x256xf32>, i32 -> vector<4x256xf32>
    %c117_i32 = arith.constant 117 : i32
    %198 = vector.broadcast %c117_i32 : i32 to vector<4x256xi32>
    %199 = arith.cmpi slt, %21, %198 : vector<4x256xi32>
    %cst_86 = arith.constant 0.000000e+00 : f32
    %200 = vector.broadcast %cst_86 : f32 to vector<4x256xf32>
    %201 = arith.select %199, %197, %200 : vector<4x256xi1>, vector<4x256xf32>
    %c120 = arith.constant 120 : index
    %c0_87 = arith.constant 0 : index
    %202 = vector.load %arg4[%c120, %c0_87] : memref<160x256xf32, #tpu.memory_space<vmem>>, vector<4x256xf32>
    tpu.vector_store %arg4[%c120, %c0_87], %201 {strides = array<i32>} : memref<160x256xf32, #tpu.memory_space<vmem>>, vector<4x256xf32>,
    %c244_i32 = arith.constant 244 : i32
    %203 = tpu.dynamic_rotate %4 by %c244_i32 dim 1 : vector<4x256xf32>, i32 -> vector<4x256xf32>
    %c116_i32 = arith.constant 116 : i32
    %204 = vector.broadcast %c116_i32 : i32 to vector<4x256xi32>
    %205 = arith.cmpi slt, %21, %204 : vector<4x256xi32>
    %cst_88 = arith.constant 0.000000e+00 : f32
    %206 = vector.broadcast %cst_88 : f32 to vector<4x256xf32>
    %207 = arith.select %205, %203, %206 : vector<4x256xi1>, vector<4x256xf32>
    %c124 = arith.constant 124 : index
    %c0_89 = arith.constant 0 : index
    %208 = vector.load %arg4[%c124, %c0_89] : memref<160x256xf32, #tpu.memory_space<vmem>>, vector<4x256xf32>
    tpu.vector_store %arg4[%c124, %c0_89], %207 {strides = array<i32>} : memref<160x256xf32, #tpu.memory_space<vmem>>, vector<4x256xf32>,
    %c243_i32 = arith.constant 243 : i32
    %209 = tpu.dynamic_rotate %4 by %c243_i32 dim 1 : vector<4x256xf32>, i32 -> vector<4x256xf32>
    %c115_i32 = arith.constant 115 : i32
    %210 = vector.broadcast %c115_i32 : i32 to vector<4x256xi32>
    %211 = arith.cmpi slt, %21, %210 : vector<4x256xi32>
    %cst_90 = arith.constant 0.000000e+00 : f32
    %212 = vector.broadcast %cst_90 : f32 to vector<4x256xf32>
    %213 = arith.select %211, %209, %212 : vector<4x256xi1>, vector<4x256xf32>
    %c128 = arith.constant 128 : index
    %c0_91 = arith.constant 0 : index
    %214 = vector.load %arg4[%c128, %c0_91] : memref<160x256xf32, #tpu.memory_space<vmem>>, vector<4x256xf32>
    tpu.vector_store %arg4[%c128, %c0_91], %213 {strides = array<i32>} : memref<160x256xf32, #tpu.memory_space<vmem>>, vector<4x256xf32>,
    %c242_i32 = arith.constant 242 : i32
    %215 = tpu.dynamic_rotate %4 by %c242_i32 dim 1 : vector<4x256xf32>, i32 -> vector<4x256xf32>
    %c114_i32 = arith.constant 114 : i32
    %216 = vector.broadcast %c114_i32 : i32 to vector<4x256xi32>
    %217 = arith.cmpi slt, %21, %216 : vector<4x256xi32>
    %cst_92 = arith.constant 0.000000e+00 : f32
    %218 = vector.broadcast %cst_92 : f32 to vector<4x256xf32>
    %219 = arith.select %217, %215, %218 : vector<4x256xi1>, vector<4x256xf32>
    %c132 = arith.constant 132 : index
    %c0_93 = arith.constant 0 : index
    %220 = vector.load %arg4[%c132, %c0_93] : memref<160x256xf32, #tpu.memory_space<vmem>>, vector<4x256xf32>
    tpu.vector_store %arg4[%c132, %c0_93], %219 {strides = array<i32>} : memref<160x256xf32, #tpu.memory_space<vmem>>, vector<4x256xf32>,
    %c241_i32 = arith.constant 241 : i32
    %221 = tpu.dynamic_rotate %4 by %c241_i32 dim 1 : vector<4x256xf32>, i32 -> vector<4x256xf32>
    %c113_i32 = arith.constant 113 : i32
    %222 = vector.broadcast %c113_i32 : i32 to vector<4x256xi32>
    %223 = arith.cmpi slt, %21, %222 : vector<4x256xi32>
    %cst_94 = arith.constant 0.000000e+00 : f32
    %224 = vector.broadcast %cst_94 : f32 to vector<4x256xf32>
    %225 = arith.select %223, %221, %224 : vector<4x256xi1>, vector<4x256xf32>
    %c136 = arith.constant 136 : index
    %c0_95 = arith.constant 0 : index
    %226 = vector.load %arg4[%c136, %c0_95] : memref<160x256xf32, #tpu.memory_space<vmem>>, vector<4x256xf32>
    tpu.vector_store %arg4[%c136, %c0_95], %225 {strides = array<i32>} : memref<160x256xf32, #tpu.memory_space<vmem>>, vector<4x256xf32>,
    %c240_i32 = arith.constant 240 : i32
    %227 = tpu.dynamic_rotate %4 by %c240_i32 dim 1 : vector<4x256xf32>, i32 -> vector<4x256xf32>
    %c112_i32 = arith.constant 112 : i32
    %228 = vector.broadcast %c112_i32 : i32 to vector<4x256xi32>
    %229 = arith.cmpi slt, %21, %228 : vector<4x256xi32>
    %cst_96 = arith.constant 0.000000e+00 : f32
    %230 = vector.broadcast %cst_96 : f32 to vector<4x256xf32>
    %231 = arith.select %229, %227, %230 : vector<4x256xi1>, vector<4x256xf32>
    %c140 = arith.constant 140 : index
    %c0_97 = arith.constant 0 : index
    %232 = vector.load %arg4[%c140, %c0_97] : memref<160x256xf32, #tpu.memory_space<vmem>>, vector<4x256xf32>
    tpu.vector_store %arg4[%c140, %c0_97], %231 {strides = array<i32>} : memref<160x256xf32, #tpu.memory_space<vmem>>, vector<4x256xf32>,
    %c239_i32 = arith.constant 239 : i32
    %233 = tpu.dynamic_rotate %4 by %c239_i32 dim 1 : vector<4x256xf32>, i32 -> vector<4x256xf32>
    %c111_i32 = arith.constant 111 : i32
    %234 = vector.broadcast %c111_i32 : i32 to vector<4x256xi32>
    %235 = arith.cmpi slt, %21, %234 : vector<4x256xi32>
    %cst_98 = arith.constant 0.000000e+00 : f32
    %236 = vector.broadcast %cst_98 : f32 to vector<4x256xf32>
    %237 = arith.select %235, %233, %236 : vector<4x256xi1>, vector<4x256xf32>
    %c144 = arith.constant 144 : index
    %c0_99 = arith.constant 0 : index
    %238 = vector.load %arg4[%c144, %c0_99] : memref<160x256xf32, #tpu.memory_space<vmem>>, vector<4x256xf32>
    tpu.vector_store %arg4[%c144, %c0_99], %237 {strides = array<i32>} : memref<160x256xf32, #tpu.memory_space<vmem>>, vector<4x256xf32>,
    %c238_i32 = arith.constant 238 : i32
    %239 = tpu.dynamic_rotate %4 by %c238_i32 dim 1 : vector<4x256xf32>, i32 -> vector<4x256xf32>
    %c110_i32 = arith.constant 110 : i32
    %240 = vector.broadcast %c110_i32 : i32 to vector<4x256xi32>
    %241 = arith.cmpi slt, %21, %240 : vector<4x256xi32>
    %cst_100 = arith.constant 0.000000e+00 : f32
    %242 = vector.broadcast %cst_100 : f32 to vector<4x256xf32>
    %243 = arith.select %241, %239, %242 : vector<4x256xi1>, vector<4x256xf32>
    %c148 = arith.constant 148 : index
    %c0_101 = arith.constant 0 : index
    %244 = vector.load %arg4[%c148, %c0_101] : memref<160x256xf32, #tpu.memory_space<vmem>>, vector<4x256xf32>
    tpu.vector_store %arg4[%c148, %c0_101], %243 {strides = array<i32>} : memref<160x256xf32, #tpu.memory_space<vmem>>, vector<4x256xf32>,
    %c237_i32 = arith.constant 237 : i32
    %245 = tpu.dynamic_rotate %4 by %c237_i32 dim 1 : vector<4x256xf32>, i32 -> vector<4x256xf32>
    %c109_i32 = arith.constant 109 : i32
    %246 = vector.broadcast %c109_i32 : i32 to vector<4x256xi32>
    %247 = arith.cmpi slt, %21, %246 : vector<4x256xi32>
    %cst_102 = arith.constant 0.000000e+00 : f32
    %248 = vector.broadcast %cst_102 : f32 to vector<4x256xf32>
    %249 = arith.select %247, %245, %248 : vector<4x256xi1>, vector<4x256xf32>
    %c152 = arith.constant 152 : index
    %c0_103 = arith.constant 0 : index
    %250 = vector.load %arg4[%c152, %c0_103] : memref<160x256xf32, #tpu.memory_space<vmem>>, vector<4x256xf32>
    tpu.vector_store %arg4[%c152, %c0_103], %249 {strides = array<i32>} : memref<160x256xf32, #tpu.memory_space<vmem>>, vector<4x256xf32>,
    %c0_i32_104 = arith.constant 0 : i32
    %251 = vector.broadcast %c0_i32_104 : i32 to vector<4x256xi32>
    %252 = arith.cmpi sgt, %21, %251 : vector<4x256xi32>
    %c1_i32_105 = arith.constant 1 : i32
    %253 = tpu.dynamic_rotate %4 by %c1_i32_105 dim 1 : vector<4x256xf32>, i32 -> vector<4x256xf32>
    %254 = arith.select %252, %253, %4 : vector<4x256xi1>, vector<4x256xf32>
    %c127_i32_106 = arith.constant 127 : i32
    %255 = vector.broadcast %c127_i32_106 : i32 to vector<4x256xi32>
    %256 = arith.cmpi slt, %21, %255 : vector<4x256xi32>
    %c255_i32_107 = arith.constant 255 : i32
    %257 = tpu.dynamic_rotate %4 by %c255_i32_107 dim 1 : vector<4x256xf32>, i32 -> vector<4x256xf32>
    %258 = arith.select %256, %257, %4 : vector<4x256xi1>, vector<4x256xf32>
    %259 = arith.maximumf %254, %4 : vector<4x256xf32>
    %260 = arith.maximumf %259, %258 : vector<4x256xf32>
    %c156 = arith.constant 156 : index
    %c0_108 = arith.constant 0 : index
    %261 = vector.load %arg4[%c156, %c0_108] : memref<160x256xf32, #tpu.memory_space<vmem>>, vector<4x256xf32>
    tpu.vector_store %arg4[%c156, %c0_108], %260 {strides = array<i32>} : memref<160x256xf32, #tpu.memory_space<vmem>>, vector<4x256xf32>,
    %c0_109 = arith.constant 0 : index
    %c0_110 = arith.constant 0 : index
    %262 = vector.load %arg1[%c0_109, %c0_110] : memref<32x160xf32, #tpu.memory_space<vmem>>, vector<32x160xf32>
    %c0_111 = arith.constant 0 : index
    %c0_112 = arith.constant 0 : index
    %263 = vector.load %arg4[%c0_111, %c0_112] : memref<160x256xf32, #tpu.memory_space<vmem>>, vector<160x256xf32>
    %cst_113 = arith.constant dense<0.000000e+00> : vector<32x256xf32>
    %264 = tpu.matmul %262, %263, %cst_113 {dimension_numbers = #tpu.dot_dimension_numbers<[1], [0], [0], [1], [0, 0, 1, 1], [], []>} : vector<32x160xf32>, vector<160x256xf32>, vector<32x256xf32> -> vector<32x256xf32>
    %cst_114 = arith.constant dense<0.000000e+00> : vector<32xf32>
    %265 = vector.multi_reduction <add>, %264, %cst_114 [1] : vector<32x256xf32> to vector<32xf32>
    %266 = vector.shape_cast %265 : vector<32xf32> to vector<32x1xf32>
    %cst_115 = arith.constant 3.906250e-03 : f32
    %267 = vector.broadcast %cst_115 : f32 to vector<32x1xf32>
    %268 = arith.mulf %266, %267 : vector<32x1xf32>
    %269 = vector.broadcast %268 : vector<32x1xf32> to vector<32x256xf32>
    %270 = arith.subf %264, %269 : vector<32x256xf32>
    %271 = arith.mulf %270, %270 : vector<32x256xf32>
    %cst_116 = arith.constant dense<0.000000e+00> : vector<32xf32>
    %272 = vector.multi_reduction <add>, %271, %cst_116 [1] : vector<32x256xf32> to vector<32xf32>
    %273 = vector.shape_cast %272 : vector<32xf32> to vector<32x1xf32>
    %cst_117 = arith.constant 3.906250e-03 : f32
    %274 = vector.broadcast %cst_117 : f32 to vector<32x1xf32>
    %275 = arith.mulf %273, %274 : vector<32x1xf32>
    %cst_118 = arith.constant 9.99999974E-6 : f32
    %276 = vector.broadcast %cst_118 : f32 to vector<32x1xf32>
    %277 = arith.addf %275, %276 : vector<32x1xf32>
    %278 = math.rsqrt %277 : vector<32x1xf32>
    %c0_119 = arith.constant 0 : index
    %c0_120 = arith.constant 0 : index
    %279 = vector.load %arg2[%c0_119, %c0_120] : memref<32x2xf32, #tpu.memory_space<vmem>>, vector<32x1xf32>
    %c0_121 = arith.constant 0 : index
    %c1_122 = arith.constant 1 : index
    %280 = vector.load %arg2[%c0_121, %c1_122] : memref<32x2xf32, #tpu.memory_space<vmem>>, vector<32x1xf32>
    %281 = arith.mulf %279, %278 : vector<32x1xf32>
    %282 = arith.mulf %268, %281 : vector<32x1xf32>
    %283 = arith.subf %280, %282 : vector<32x1xf32>
    %284 = vector.broadcast %281 : vector<32x1xf32> to vector<32x256xf32>
    %285 = arith.mulf %264, %284 : vector<32x256xf32>
    %286 = vector.broadcast %283 : vector<32x1xf32> to vector<32x256xf32>
    %287 = arith.addf %285, %286 : vector<32x256xf32>
    %cst_123 = arith.constant 0.000000e+00 : f32
    %288 = vector.broadcast %cst_123 : f32 to vector<32x256xf32>
    %289 = arith.maximumf %287, %288 : vector<32x256xf32>
    %c0_124 = arith.constant 0 : index
    %c0_125 = arith.constant 0 : index
    %290 = vector.load %arg3[%c0_124, %c0_125] : memref<32x256xf32, #tpu.memory_space<vmem>>, vector<32x256xf32>
    tpu.vector_store %arg3[%c0_124, %c0_125], %289 {strides = array<i32>} : memref<32x256xf32, #tpu.memory_space<vmem>>, vector<32x256xf32>,
    return
  }
}

</mosaic_0001>

<llo_original>
// kernel: inception_forward.1
$region0: #{inception_forward.1}
  #allocation0 [shape = 'u32[]', space=smem, size = 0x4, offset = 0x4, fixed_abs, tag = 'smem constant byte address 0x4 - core index']
  #allocation1 [shape = 'u32[72,128]{1,0:T(1,128)}', space=vmem, size = 0x9000, scoped, tag = 'internal scratch']
  #allocation2 [shape = 'f32[160,256]{1,0:T(8,128)}', space=vmem, size = 0x28000, scoped, tag = 'scratch operand']
  %s0 = inlined_call_operand.vmem [shape: f32[2,4,128], index: 0, kind: input, shape index: {}]
  %s1 = inlined_call_operand.hbm [shape: f32[32,160], index: 1, kind: input, shape index: {}]
  %s2 = inlined_call_operand.vmem [shape: f32[32,2], index: 2, kind: input, shape index: {}]
  %s3 = inlined_call_operand.vmem [shape: f32[32,256], index: 3, kind: output, shape index: {}]
  %s4 = sld [smem:[#allocation0]]
  $region26: #{inception_forward.1} parent=0
    _
  %s6 = ssub.s32 1, %s4
  %s7 = scalar_select 0, %s6, %s4
  $region1: #{inception_forward.1} parent=0
    #allocation3 [shape = 'u8[32768]{0}', space=vmem, size = 0x8000, scoped, tag = 'input window, operand 1, single buffered']
    #allocation4 [shape = 's32[1]{0}', space=sflag, size = 0x4, scoped, tag = 'scoped memory for inception_forward.1']
    %8 = vsyncpa [#allocation4], 0
    // Predicated region
    $region2: #{inception_forward.1} parent=1 // pred_check
      _
    $region3: #{inception_forward.1} parent=1 // pred_check_branch
      %10 = sbr.rel (0) target = $region5
    $region4: #{inception_forward.1} parent=1 // pred_region
      _
    $region5: #{inception_forward.1} parent=1 // pred_fallthru
      _
    // Predicated region
    $region6: #{inception_forward.1} parent=1 // pred_check
      _
    $region7: #{inception_forward.1} parent=1 // pred_check_branch
      %12 = sbr.rel (0) target = $region9
    $region8: #{inception_forward.1} parent=1 // pred_region
      %14 = vsyncadd [#allocation4], 0
      %s15 = sshll.u32 %s1, 4
      %s16 = int_to_ptr.hbm [resolvable:$true] %s15
      %s17 = sshll.u32 [#allocation3], 4
      %s18 = int_to_ptr.vmem [resolvable:$true] %s17
      %23 = dma.hbm_to_vmem [thread:$0]  %s16, 1024, %s18, [#allocation4], 256, 256, 16
    $region9: #{inception_forward.1} parent=1 // pred_fallthru
      _
    // Predicated region
    $region10: #{inception_forward.1} parent=1 // pred_check
      _
    $region11: #{inception_forward.1} parent=1 // pred_check_branch
      %25 = sbr.rel (0) target = $region13
    $region12: #{inception_forward.1} parent=1 // pred_region
      _
    $region13: #{inception_forward.1} parent=1 // pred_fallthru
      _
    // Predicated region
    $region14: #{inception_forward.1} parent=1 // pred_check
      _
    $region15: #{inception_forward.1} parent=1 // pred_check_branch
      %27 = sbr.rel (0) target = $region17
    $region16: #{inception_forward.1} parent=1 // pred_region
      %29 = dma.done [#allocation4], 1024
    $region17: #{inception_forward.1} parent=1 // pred_fallthru
      _
    %v30 = vld [vmem:[%s0] sm:$0xf]
    %s31 = scalar_lea.vmem %s0, 4
    %v32 = vld [vmem:[%s31] sm:$0xf]
    %v33 = vlaneseq
    %v34 = vand.u32 %v33, 127
    %v35 = vadd.s32 %v34, 128
    %vm36 = vcmp.lt.s32.totalorder %v34, 0
    %v37 = vsub.s32 0, %v34
    %v38 = vsel %vm36, %v37, %v34
    %v39 = vshrl.u32 %v38, 7
    %v40 = vand.u32 %v38, 127
    %v41 = vsub.s32 0, %v40
    %v42 = vsel %vm36, %v41, %v40
    %vm43 = vcmp.lt.s32.totalorder %v35, 0
    %v44 = vsub.s32 0, %v35
    %v45 = vsel %vm43, %v44, %v35
    %v46 = vshrl.u32 %v45, 7
    %v47 = vand.u32 %v45, 127
    %v48 = vsub.s32 0, %v47
    %v49 = vsel %vm43, %v48, %v47
    %vm50 = vcmp.ne.s32.totalorder %v42, 0
    %vm51 = vcmp.ne.s32.totalorder %v49, 0
    %vm52 = vcmp.lt.s32.totalorder %v42, 0
    %vm53 = vcmp.lt.s32.totalorder %v49, 0
    %vm54 = vmand %vm52, %vm50
    %vm55 = vmand %vm53, %vm51
    %v56 = vadd.s32 %v42, 128
    %v57 = vadd.s32 %v49, 128
    %v58 = vsel %vm54, %v56, %v42
    %v59 = vsel %vm55, %v57, %v49
    %60 = vrot.lane.b32.xlu0 %v30, 19
    %v61 = vpop.permute.xlu0 %60
    %62 = vrot.lane.b32.xlu0 %v32, 19
    %v63 = vpop.permute.xlu0 %62
    %vm64 = vcmp.lt.s32.totalorder %v34, 19
    %v65 = vsel %vm64, %v61, %v63
    %v66 = vsel %vm64, %v63, %v61
    %vm67 = vcmp.ge.s32.totalorder %v58, 19
    %vm68 = vcmp.ge.s32.totalorder %v59, 19
    %v69 = vsel %vm67, %v66, 0.0
    %v70 = vsel %vm68, %v65, 0.0
    %71 = vst [vmem:[#allocation2] sm:$0xf] %v69
    %72 = vst [vmem:[#allocation2 + $0x8] sm:$0xf] %v70
    %73 = vrot.lane.b32.xlu0 %v30, 18
    %v74 = vpop.permute.xlu0 %73
    %75 = vrot.lane.b32.xlu0 %v32, 18
    %v76 = vpop.permute.xlu0 %75
    %vm77 = vcmp.lt.s32.totalorder %v34, 18
    %v78 = vsel %vm77, %v74, %v76
    %v79 = vsel %vm77, %v76, %v74
    %vm80 = vcmp.ge.s32.totalorder %v58, 18
    %vm81 = vcmp.ge.s32.totalorder %v59, 18
    %v82 = vsel %vm80, %v79, 0.0
    %v83 = vsel %vm81, %v78, 0.0
    %v86 = vrot.slane %v82, 4
    %v87 = vrot.slane %v83, 4
    %90 = vst [vmem:[#allocation2] sm:$0xf0] %v86
    %91 = vst [vmem:[#allocation2 + $0x8] sm:$0xf0] %v87
    %92 = vrot.lane.b32.xlu0 %v30, 17
    %v93 = vpop.permute.xlu0 %92
    %94 = vrot.lane.b32.xlu0 %v32, 17
    %v95 = vpop.permute.xlu0 %94
    %vm96 = vcmp.lt.s32.totalorder %v34, 17
    %v97 = vsel %vm96, %v93, %v95
    %v98 = vsel %vm96, %v95, %v93
    %vm99 = vcmp.ge.s32.totalorder %v58, 17
    %vm100 = vcmp.ge.s32.totalorder %v59, 17
    %v101 = vsel %vm99, %v98, 0.0
    %v102 = vsel %vm100, %v97, 0.0
    %103 = vst [vmem:[#allocation2 + $0x10] sm:$0xf] %v101
    %104 = vst [vmem:[#allocation2 + $0x18] sm:$0xf] %v102
    %105 = vrot.lane.b32.xlu0 %v30, 16
    %v106 = vpop.permute.xlu0 %105
    %107 = vrot.lane.b32.xlu0 %v32, 16
    %v108 = vpop.permute.xlu0 %107
    %vm109 = vcmp.lt.s32.totalorder %v34, 16
    %v110 = vsel %vm109, %v106, %v108
    %v111 = vsel %vm109, %v108, %v106
    %vm112 = vcmp.ge.s32.totalorder %v58, 16
    %vm113 = vcmp.ge.s32.totalorder %v59, 16
    %v114 = vsel %vm112, %v111, 0.0
    %v115 = vsel %vm113, %v110, 0.0
    %v118 = vrot.slane %v114, 4
    %v119 = vrot.slane %v115, 4
    %122 = vst [vmem:[#allocation2 + $0x10] sm:$0xf0] %v118
    %123 = vst [vmem:[#allocation2 + $0x18] sm:$0xf0] %v119
    %124 = vrot.lane.b32.xlu0 %v30, 15
    %v125 = vpop.permute.xlu0 %124
    %126 = vrot.lane.b32.xlu0 %v32, 15
    %v127 = vpop.permute.xlu0 %126
    %vm128 = vcmp.lt.s32.totalorder %v34, 15
    %v129 = vsel %vm128, %v125, %v127
    %v130 = vsel %vm128, %v127, %v125
    %vm131 = vcmp.ge.s32.totalorder %v58, 15
    %vm132 = vcmp.ge.s32.totalorder %v59, 15
    %v133 = vsel %vm131, %v130, 0.0
    %v134 = vsel %vm132, %v129, 0.0
    %135 = vst [vmem:[#allocation2 + $0x20] sm:$0xf] %v133
    %136 = vst [vmem:[#allocation2 + $0x28] sm:$0xf] %v134
    %137 = vrot.lane.b32.xlu0 %v30, 14
    %v138 = vpop.permute.xlu0 %137
    %139 = vrot.lane.b32.xlu0 %v32, 14
    %v140 = vpop.permute.xlu0 %139
    %vm141 = vcmp.lt.s32.totalorder %v34, 14
    %v142 = vsel %vm141, %v138, %v140
    %v143 = vsel %vm141, %v140, %v138
    %vm144 = vcmp.ge.s32.totalorder %v58, 14
    %vm145 = vcmp.ge.s32.totalorder %v59, 14
    %v146 = vsel %vm144, %v143, 0.0
    %v147 = vsel %vm145, %v142, 0.0
    %v150 = vrot.slane %v146, 4
    %v151 = vrot.slane %v147, 4
    %154 = vst [vmem:[#allocation2 + $0x20] sm:$0xf0] %v150
    %155 = vst [vmem:[#allocation2 + $0x28] sm:$0xf0] %v151
    %156 = vrot.lane.b32.xlu0 %v30, 13
    %v157 = vpop.permute.xlu0 %156
    %158 = vrot.lane.b32.xlu0 %v32, 13
    %v159 = vpop.permute.xlu0 %158
    %vm160 = vcmp.lt.s32.totalorder %v34, 13
    %v161 = vsel %vm160, %v157, %v159
    %v162 = vsel %vm160, %v159, %v157
    %vm163 = vcmp.ge.s32.totalorder %v58, 13
    %vm164 = vcmp.ge.s32.totalorder %v59, 13
    %v165 = vsel %vm163, %v162, 0.0
    %v166 = vsel %vm164, %v161, 0.0
    %167 = vst [vmem:[#allocation2 + $0x30] sm:$0xf] %v165
    %168 = vst [vmem:[#allocation2 + $0x38] sm:$0xf] %v166
    %169 = vrot.lane.b32.xlu0 %v30, 12
    %v170 = vpop.permute.xlu0 %169
    %171 = vrot.lane.b32.xlu0 %v32, 12
    %v172 = vpop.permute.xlu0 %171
    %vm173 = vcmp.lt.s32.totalorder %v34, 12
    %v174 = vsel %vm173, %v170, %v172
    %v175 = vsel %vm173, %v172, %v170
    %vm176 = vcmp.ge.s32.totalorder %v58, 12
    %vm177 = vcmp.ge.s32.totalorder %v59, 12
    %v178 = vsel %vm176, %v175, 0.0
    %v179 = vsel %vm177, %v174, 0.0
    %v182 = vrot.slane %v178, 4
    %v183 = vrot.slane %v179, 4
    %186 = vst [vmem:[#allocation2 + $0x30] sm:$0xf0] %v182
    %187 = vst [vmem:[#allocation2 + $0x38] sm:$0xf0] %v183
    %188 = vrot.lane.b32.xlu0 %v30, 11
    %v189 = vpop.permute.xlu0 %188
    %190 = vrot.lane.b32.xlu0 %v32, 11
    %v191 = vpop.permute.xlu0 %190
    %vm192 = vcmp.lt.s32.totalorder %v34, 11
    %v193 = vsel %vm192, %v189, %v191
    %v194 = vsel %vm192, %v191, %v189
    %vm195 = vcmp.ge.s32.totalorder %v58, 11
    %vm196 = vcmp.ge.s32.totalorder %v59, 11
    %v197 = vsel %vm195, %v194, 0.0
    %v198 = vsel %vm196, %v193, 0.0
    %199 = vst [vmem:[#allocation2 + $0x40] sm:$0xf] %v197
    %200 = vst [vmem:[#allocation2 + $0x48] sm:$0xf] %v198
    %201 = vrot.lane.b32.xlu0 %v30, 10
    %v202 = vpop.permute.xlu0 %201
    %203 = vrot.lane.b32.xlu0 %v32, 10
    %v204 = vpop.permute.xlu0 %203
    %vm205 = vcmp.lt.s32.totalorder %v34, 10
    %v206 = vsel %vm205, %v202, %v204
    %v207 = vsel %vm205, %v204, %v202
    %vm208 = vcmp.ge.s32.totalorder %v58, 10
    %vm209 = vcmp.ge.s32.totalorder %v59, 10
    %v210 = vsel %vm208, %v207, 0.0
    %v211 = vsel %vm209, %v206, 0.0
    %v214 = vrot.slane %v210, 4
    %v215 = vrot.slane %v211, 4
    %218 = vst [vmem:[#allocation2 + $0x40] sm:$0xf0] %v214
    %219 = vst [vmem:[#allocation2 + $0x48] sm:$0xf0] %v215
    %220 = vrot.lane.b32.xlu0 %v30, 9
    %v221 = vpop.permute.xlu0 %220
    %222 = vrot.lane.b32.xlu0 %v32, 9
    %v223 = vpop.permute.xlu0 %222
    %vm224 = vcmp.lt.s32.totalorder %v34, 9
    %v225 = vsel %vm224, %v221, %v223
    %v226 = vsel %vm224, %v223, %v221
    %vm227 = vcmp.ge.s32.totalorder %v58, 9
    %vm228 = vcmp.ge.s32.totalorder %v59, 9
    %v229 = vsel %vm227, %v226, 0.0
    %v230 = vsel %vm228, %v225, 0.0
    %231 = vst [vmem:[#allocation2 + $0x50] sm:$0xf] %v229
    %232 = vst [vmem:[#allocation2 + $0x58] sm:$0xf] %v230
    %233 = vrot.lane.b32.xlu0 %v30, 8
    %v234 = vpop.permute.xlu0 %233
    %235 = vrot.lane.b32.xlu0 %v32, 8
    %v236 = vpop.permute.xlu0 %235
    %vm237 = vcmp.lt.s32.totalorder %v34, 8
    %v238 = vsel %vm237, %v234, %v236
    %v239 = vsel %vm237, %v236, %v234
    %vm240 = vcmp.ge.s32.totalorder %v58, 8
    %vm241 = vcmp.ge.s32.totalorder %v59, 8
    %v242 = vsel %vm240, %v239, 0.0
    %v243 = vsel %vm241, %v238, 0.0
    %v246 = vrot.slane %v242, 4
    %v247 = vrot.slane %v243, 4
    %250 = vst [vmem:[#allocation2 + $0x50] sm:$0xf0] %v246
    %251 = vst [vmem:[#allocation2 + $0x58] sm:$0xf0] %v247
    %252 = vrot.lane.b32.xlu0 %v30, 7
    %v253 = vpop.permute.xlu0 %252
    %254 = vrot.lane.b32.xlu0 %v32, 7
    %v255 = vpop.permute.xlu0 %254
    %vm256 = vcmp.lt.s32.totalorder %v34, 7
    %v257 = vsel %vm256, %v253, %v255
    %v258 = vsel %vm256, %v255, %v253
    %vm259 = vcmp.ge.s32.totalorder %v58, 7
    %vm260 = vcmp.ge.s32.totalorder %v59, 7
    %v261 = vsel %vm259, %v258, 0.0
    %v262 = vsel %vm260, %v257, 0.0
    %263 = vst [vmem:[#allocation2 + $0x60] sm:$0xf] %v261
    %264 = vst [vmem:[#allocation2 + $0x68] sm:$0xf] %v262
    %265 = vrot.lane.b32.xlu0 %v30, 6
    %v266 = vpop.permute.xlu0 %265
    %267 = vrot.lane.b32.xlu0 %v32, 6
    %v268 = vpop.permute.xlu0 %267
    %vm269 = vcmp.lt.s32.totalorder %v34, 6
    %v270 = vsel %vm269, %v266, %v268
    %v271 = vsel %vm269, %v268, %v266
    %vm272 = vcmp.ge.s32.totalorder %v58, 6
    %vm273 = vcmp.ge.s32.totalorder %v59, 6
    %v274 = vsel %vm272, %v271, 0.0
    %v275 = vsel %vm273, %v270, 0.0
    %v278 = vrot.slane %v274, 4
    %v279 = vrot.slane %v275, 4
    %282 = vst [vmem:[#allocation2 + $0x60] sm:$0xf0] %v278
    %283 = vst [vmem:[#allocation2 + $0x68] sm:$0xf0] %v279
    %284 = vrot.lane.b32.xlu0 %v30, 5
    %v285 = vpop.permute.xlu0 %284
    %286 = vrot.lane.b32.xlu0 %v32, 5
    %v287 = vpop.permute.xlu0 %286
    %vm288 = vcmp.lt.s32.totalorder %v34, 5
    %v289 = vsel %vm288, %v285, %v287
    %v290 = vsel %vm288, %v287, %v285
    %vm291 = vcmp.ge.s32.totalorder %v58, 5
    %vm292 = vcmp.ge.s32.totalorder %v59, 5
    %v293 = vsel %vm291, %v290, 0.0
    %v294 = vsel %vm292, %v289, 0.0
    %295 = vst [vmem:[#allocation2 + $0x70] sm:$0xf] %v293
    %296 = vst [vmem:[#allocation2 + $0x78] sm:$0xf] %v294
    %297 = vrot.lane.b32.xlu0 %v30, 4
    %v298 = vpop.permute.xlu0 %297
    %299 = vrot.lane.b32.xlu0 %v32, 4
    %v300 = vpop.permute.xlu0 %299
    %vm301 = vcmp.lt.s32.totalorder %v34, 4
    %v302 = vsel %vm301, %v298, %v300
    %v303 = vsel %vm301, %v300, %v298
    %vm304 = vcmp.ge.s32.totalorder %v58, 4
    %vm305 = vcmp.ge.s32.totalorder %v59, 4
    %v306 = vsel %vm304, %v303, 0.0
    %v307 = vsel %vm305, %v302, 0.0
    %v310 = vrot.slane %v306, 4
    %v311 = vrot.slane %v307, 4
    %314 = vst [vmem:[#allocation2 + $0x70] sm:$0xf0] %v310
    %315 = vst [vmem:[#allocation2 + $0x78] sm:$0xf0] %v311
    %316 = vrot.lane.b32.xlu0 %v30, 3
    %v317 = vpop.permute.xlu0 %316
    %318 = vrot.lane.b32.xlu0 %v32, 3
    %v319 = vpop.permute.xlu0 %318
    %vm320 = vcmp.lt.s32.totalorder %v34, 3
    %v321 = vsel %vm320, %v317, %v319
    %v322 = vsel %vm320, %v319, %v317
    %vm323 = vcmp.ge.s32.totalorder %v58, 3
    %vm324 = vcmp.ge.s32.totalorder %v59, 3
    %v325 = vsel %vm323, %v322, 0.0
    %v326 = vsel %vm324, %v321, 0.0
    %327 = vst [vmem:[#allocation2 + $0x80] sm:$0xf] %v325
    %328 = vst [vmem:[#allocation2 + $0x88] sm:$0xf] %v326
    %329 = vrot.lane.b32.xlu0 %v30, 2
    %v330 = vpop.permute.xlu0 %329
    %331 = vrot.lane.b32.xlu0 %v32, 2
    %v332 = vpop.permute.xlu0 %331
    %vm333 = vcmp.lt.s32.totalorder %v34, 2
    %v334 = vsel %vm333, %v330, %v332
    %v335 = vsel %vm333, %v332, %v330
    %vm336 = vcmp.ge.s32.totalorder %v58, 2
    %vm337 = vcmp.ge.s32.totalorder %v59, 2
    %v338 = vsel %vm336, %v335, 0.0
    %v339 = vsel %vm337, %v334, 0.0
    %v342 = vrot.slane %v338, 4
    %v343 = vrot.slane %v339, 4
    %346 = vst [vmem:[#allocation2 + $0x80] sm:$0xf0] %v342
    %347 = vst [vmem:[#allocation2 + $0x88] sm:$0xf0] %v343
    %348 = vrot.lane.b32.xlu0 %v30, 1
    %v349 = vpop.permute.xlu0 %348
    %350 = vrot.lane.b32.xlu0 %v32, 1
    %v351 = vpop.permute.xlu0 %350
    %vm352 = vcmp.lt.s32.totalorder %v34, 1
    %v353 = vsel %vm352, %v349, %v351
    %v354 = vsel %vm352, %v351, %v349
    %vm355 = vcmp.ge.s32.totalorder %v58, 1
    %vm356 = vcmp.ge.s32.totalorder %v59, 1
    %v357 = vsel %vm355, %v354, 0.0
    %v358 = vsel %vm356, %v353, 0.0
    %359 = vst [vmem:[#allocation2 + $0x90] sm:$0xf] %v357
    %360 = vst [vmem:[#allocation2 + $0x98] sm:$0xf] %v358
    %v363 = vrot.slane %v30, 4
    %v364 = vrot.slane %v32, 4
    %367 = vst [vmem:[#allocation2 + $0x90] sm:$0xf0] %v363
    %368 = vst [vmem:[#allocation2 + $0x98] sm:$0xf0] %v364
    %369 = vrot.lane.b32.xlu0 %v30, 127
    %v370 = vpop.permute.xlu0 %369
    %371 = vrot.lane.b32.xlu0 %v32, 127
    %v372 = vpop.permute.xlu0 %371
    %vm373 = vcmp.lt.s32.totalorder %v34, 127
    %v374 = vsel %vm373, %v370, %v372
    %v375 = vsel %vm373, %v372, %v370
    %vm376 = vcmp.lt.s32.totalorder %v58, 127
    %vm377 = vcmp.lt.s32.totalorder %v59, 127
    %v378 = vsel %vm376, %v374, 0.0
    %v379 = vsel %vm377, %v375, 0.0
    %380 = vst [vmem:[#allocation2 + $0xa0] sm:$0xf] %v378
    %381 = vst [vmem:[#allocation2 + $0xa8] sm:$0xf] %v379
    %382 = vrot.lane.b32.xlu0 %v30, 126
    %v383 = vpop.permute.xlu0 %382
    %384 = vrot.lane.b32.xlu0 %v32, 126
    %v385 = vpop.permute.xlu0 %384
    %vm386 = vcmp.lt.s32.totalorder %v34, 126
    %v387 = vsel %vm386, %v383, %v385
    %v388 = vsel %vm386, %v385, %v383
    %vm389 = vcmp.lt.s32.totalorder %v58, 126
    %vm390 = vcmp.lt.s32.totalorder %v59, 126
    %v391 = vsel %vm389, %v387, 0.0
    %v392 = vsel %vm390, %v388, 0.0
    %v395 = vrot.slane %v391, 4
    %v396 = vrot.slane %v392, 4
    %399 = vst [vmem:[#allocation2 + $0xa0] sm:$0xf0] %v395
    %400 = vst [vmem:[#allocation2 + $0xa8] sm:$0xf0] %v396
    %401 = vrot.lane.b32.xlu0 %v30, 125
    %v402 = vpop.permute.xlu0 %401
    %403 = vrot.lane.b32.xlu0 %v32, 125
    %v404 = vpop.permute.xlu0 %403
    %vm405 = vcmp.lt.s32.totalorder %v34, 125
    %v406 = vsel %vm405, %v402, %v404
    %v407 = vsel %vm405, %v404, %v402
    %vm408 = vcmp.lt.s32.totalorder %v58, 125
    %vm409 = vcmp.lt.s32.totalorder %v59, 125
    %v410 = vsel %vm408, %v406, 0.0
    %v411 = vsel %vm409, %v407, 0.0
    %412 = vst [vmem:[#allocation2 + $0xb0] sm:$0xf] %v410
    %413 = vst [vmem:[#allocation2 + $0xb8] sm:$0xf] %v411
    %414 = vrot.lane.b32.xlu0 %v30, 124
    %v415 = vpop.permute.xlu0 %414
    %416 = vrot.lane.b32.xlu0 %v32, 124
    %v417 = vpop.permute.xlu0 %416
    %vm418 = vcmp.lt.s32.totalorder %v34, 124
    %v419 = vsel %vm418, %v415, %v417
    %v420 = vsel %vm418, %v417, %v415
    %vm421 = vcmp.lt.s32.totalorder %v58, 124
    %vm422 = vcmp.lt.s32.totalorder %v59, 124
    %v423 = vsel %vm421, %v419, 0.0
    %v424 = vsel %vm422, %v420, 0.0
    %v427 = vrot.slane %v423, 4
    %v428 = vrot.slane %v424, 4
    %431 = vst [vmem:[#allocation2 + $0xb0] sm:$0xf0] %v427
    %432 = vst [vmem:[#allocation2 + $0xb8] sm:$0xf0] %v428
    %433 = vrot.lane.b32.xlu0 %v30, 123
    %v434 = vpop.permute.xlu0 %433
    %435 = vrot.lane.b32.xlu0 %v32, 123
    %v436 = vpop.permute.xlu0 %435
    %vm437 = vcmp.lt.s32.totalorder %v34, 123
    %v438 = vsel %vm437, %v434, %v436
    %v439 = vsel %vm437, %v436, %v434
    %vm440 = vcmp.lt.s32.totalorder %v58, 123
    %vm441 = vcmp.lt.s32.totalorder %v59, 123
    %v442 = vsel %vm440, %v438, 0.0
    %v443 = vsel %vm441, %v439, 0.0
    %444 = vst [vmem:[#allocation2 + $0xc0] sm:$0xf] %v442
    %445 = vst [vmem:[#allocation2 + $0xc8] sm:$0xf] %v443
    %446 = vrot.lane.b32.xlu0 %v30, 122
    %v447 = vpop.permute.xlu0 %446
    %448 = vrot.lane.b32.xlu0 %v32, 122
    %v449 = vpop.permute.xlu0 %448
    %vm450 = vcmp.lt.s32.totalorder %v34, 122
    %v451 = vsel %vm450, %v447, %v449
    %v452 = vsel %vm450, %v449, %v447
    %vm453 = vcmp.lt.s32.totalorder %v58, 122
    %vm454 = vcmp.lt.s32.totalorder %v59, 122
    %v455 = vsel %vm453, %v451, 0.0
    %v456 = vsel %vm454, %v452, 0.0
    %v459 = vrot.slane %v455, 4
    %v460 = vrot.slane %v456, 4
    %463 = vst [vmem:[#allocation2 + $0xc0] sm:$0xf0] %v459
    %464 = vst [vmem:[#allocation2 + $0xc8] sm:$0xf0] %v460
    %465 = vrot.lane.b32.xlu0 %v30, 121
    %v466 = vpop.permute.xlu0 %465
    %467 = vrot.lane.b32.xlu0 %v32, 121
    %v468 = vpop.permute.xlu0 %467
    %vm469 = vcmp.lt.s32.totalorder %v34, 121
    %v470 = vsel %vm469, %v466, %v468
    %v471 = vsel %vm469, %v468, %v466
    %vm472 = vcmp.lt.s32.totalorder %v58, 121
    %vm473 = vcmp.lt.s32.totalorder %v59, 121
    %v474 = vsel %vm472, %v470, 0.0
    %v475 = vsel %vm473, %v471, 0.0
    %476 = vst [vmem:[#allocation2 + $0xd0] sm:$0xf] %v474
    %477 = vst [vmem:[#allocation2 + $0xd8] sm:$0xf] %v475
    %478 = vrot.lane.b32.xlu0 %v30, 120
    %v479 = vpop.permute.xlu0 %478
    %480 = vrot.lane.b32.xlu0 %v32, 120
    %v481 = vpop.permute.xlu0 %480
    %vm482 = vcmp.lt.s32.totalorder %v34, 120
    %v483 = vsel %vm482, %v479, %v481
    %v484 = vsel %vm482, %v481, %v479
    %vm485 = vcmp.lt.s32.totalorder %v58, 120
    %vm486 = vcmp.lt.s32.totalorder %v59, 120
    %v487 = vsel %vm485, %v483, 0.0
    %v488 = vsel %vm486, %v484, 0.0
    %v491 = vrot.slane %v487, 4
    %v492 = vrot.slane %v488, 4
    %495 = vst [vmem:[#allocation2 + $0xd0] sm:$0xf0] %v491
    %496 = vst [vmem:[#allocation2 + $0xd8] sm:$0xf0] %v492
    %497 = vrot.lane.b32.xlu0 %v30, 119
    %v498 = vpop.permute.xlu0 %497
    %499 = vrot.lane.b32.xlu0 %v32, 119
    %v500 = vpop.permute.xlu0 %499
    %vm501 = vcmp.lt.s32.totalorder %v34, 119
    %v502 = vsel %vm501, %v498, %v500
    %v503 = vsel %vm501, %v500, %v498
    %vm504 = vcmp.lt.s32.totalorder %v58, 119
    %vm505 = vcmp.lt.s32.totalorder %v59, 119
    %v506 = vsel %vm504, %v502, 0.0
    %v507 = vsel %vm505, %v503, 0.0
    %508 = vst [vmem:[#allocation2 + $0xe0] sm:$0xf] %v506
    %509 = vst [vmem:[#allocation2 + $0xe8] sm:$0xf] %v507
    %510 = vrot.lane.b32.xlu0 %v30, 118
    %v511 = vpop.permute.xlu0 %510
    %512 = vrot.lane.b32.xlu0 %v32, 118
    %v513 = vpop.permute.xlu0 %512
    %vm514 = vcmp.lt.s32.totalorder %v34, 118
    %v515 = vsel %vm514, %v511, %v513
    %v516 = vsel %vm514, %v513, %v511
    %vm517 = vcmp.lt.s32.totalorder %v58, 118
    %vm518 = vcmp.lt.s32.totalorder %v59, 118
    %v519 = vsel %vm517, %v515, 0.0
    %v520 = vsel %vm518, %v516, 0.0
    %v523 = vrot.slane %v519, 4
    %v524 = vrot.slane %v520, 4
    %527 = vst [vmem:[#allocation2 + $0xe0] sm:$0xf0] %v523
    %528 = vst [vmem:[#allocation2 + $0xe8] sm:$0xf0] %v524
    %529 = vrot.lane.b32.xlu0 %v30, 117
    %v530 = vpop.permute.xlu0 %529
    %531 = vrot.lane.b32.xlu0 %v32, 117
    %v532 = vpop.permute.xlu0 %531
    %vm533 = vcmp.lt.s32.totalorder %v34, 117
    %v534 = vsel %vm533, %v530, %v532
    %v535 = vsel %vm533, %v532, %v530
    %vm536 = vcmp.lt.s32.totalorder %v58, 117
    %vm537 = vcmp.lt.s32.totalorder %v59, 117
    %v538 = vsel %vm536, %v534, 0.0
    %v539 = vsel %vm537, %v535, 0.0
    %540 = vst [vmem:[#allocation2 + $0xf0] sm:$0xf] %v538
    %541 = vst [vmem:[#allocation2 + $0xf8] sm:$0xf] %v539
    %542 = vrot.lane.b32.xlu0 %v30, 116
    %v543 = vpop.permute.xlu0 %542
    %544 = vrot.lane.b32.xlu0 %v32, 116
    %v545 = vpop.permute.xlu0 %544
    %vm546 = vcmp.lt.s32.totalorder %v34, 116
    %v547 = vsel %vm546, %v543, %v545
    %v548 = vsel %vm546, %v545, %v543
    %vm549 = vcmp.lt.s32.totalorder %v58, 116
    %vm550 = vcmp.lt.s32.totalorder %v59, 116
    %v551 = vsel %vm549, %v547, 0.0
    %v552 = vsel %vm550, %v548, 0.0
    %v555 = vrot.slane %v551, 4
    %v556 = vrot.slane %v552, 4
    %559 = vst [vmem:[#allocation2 + $0xf0] sm:$0xf0] %v555
    %560 = vst [vmem:[#allocation2 + $0xf8] sm:$0xf0] %v556
    %561 = vrot.lane.b32.xlu0 %v30, 115
    %v562 = vpop.permute.xlu0 %561
    %563 = vrot.lane.b32.xlu0 %v32, 115
    %v564 = vpop.permute.xlu0 %563
    %vm565 = vcmp.lt.s32.totalorder %v34, 115
    %v566 = vsel %vm565, %v562, %v564
    %v567 = vsel %vm565, %v564, %v562
    %vm568 = vcmp.lt.s32.totalorder %v58, 115
    %vm569 = vcmp.lt.s32.totalorder %v59, 115
    %v570 = vsel %vm568, %v566, 0.0
    %v571 = vsel %vm569, %v567, 0.0
    %572 = vst [vmem:[#allocation2 + $0x100] sm:$0xf] %v570
    %573 = vst [vmem:[#allocation2 + $0x108] sm:$0xf] %v571
    %574 = vrot.lane.b32.xlu0 %v30, 114
    %v575 = vpop.permute.xlu0 %574
    %576 = vrot.lane.b32.xlu0 %v32, 114
    %v577 = vpop.permute.xlu0 %576
    %vm578 = vcmp.lt.s32.totalorder %v34, 114
    %v579 = vsel %vm578, %v575, %v577
    %v580 = vsel %vm578, %v577, %v575
    %vm581 = vcmp.lt.s32.totalorder %v58, 114
    %vm582 = vcmp.lt.s32.totalorder %v59, 114
    %v583 = vsel %vm581, %v579, 0.0
    %v584 = vsel %vm582, %v580, 0.0
    %v587 = vrot.slane %v583, 4
    %v588 = vrot.slane %v584, 4
    %591 = vst [vmem:[#allocation2 + $0x100] sm:$0xf0] %v587
    %592 = vst [vmem:[#allocation2 + $0x108] sm:$0xf0] %v588
    %593 = vrot.lane.b32.xlu0 %v30, 113
    %v594 = vpop.permute.xlu0 %593
    %595 = vrot.lane.b32.xlu0 %v32, 113
    %v596 = vpop.permute.xlu0 %595
    %vm597 = vcmp.lt.s32.totalorder %v34, 113
    %v598 = vsel %vm597, %v594, %v596
    %v599 = vsel %vm597, %v596, %v594
    %vm600 = vcmp.lt.s32.totalorder %v58, 113
    %vm601 = vcmp.lt.s32.totalorder %v59, 113
    %v602 = vsel %vm600, %v598, 0.0
    %v603 = vsel %vm601, %v599, 0.0
    %604 = vst [vmem:[#allocation2 + $0x110] sm:$0xf] %v602
    %605 = vst [vmem:[#allocation2 + $0x118] sm:$0xf] %v603
    %606 = vrot.lane.b32.xlu0 %v30, 112
    %v607 = vpop.permute.xlu0 %606
    %608 = vrot.lane.b32.xlu0 %v32, 112
    %v609 = vpop.permute.xlu0 %608
    %vm610 = vcmp.lt.s32.totalorder %v34, 112
    %v611 = vsel %vm610, %v607, %v609
    %v612 = vsel %vm610, %v609, %v607
    %vm613 = vcmp.lt.s32.totalorder %v58, 112
    %vm614 = vcmp.lt.s32.totalorder %v59, 112
    %v615 = vsel %vm613, %v611, 0.0
    %v616 = vsel %vm614, %v612, 0.0
    %v619 = vrot.slane %v615, 4
    %v620 = vrot.slane %v616, 4
    %623 = vst [vmem:[#allocation2 + $0x110] sm:$0xf0] %v619
    %624 = vst [vmem:[#allocation2 + $0x118] sm:$0xf0] %v620
    %625 = vrot.lane.b32.xlu0 %v30, 111
    %v626 = vpop.permute.xlu0 %625
    %627 = vrot.lane.b32.xlu0 %v32, 111
    %v628 = vpop.permute.xlu0 %627
    %vm629 = vcmp.lt.s32.totalorder %v34, 111
    %v630 = vsel %vm629, %v626, %v628
    %v631 = vsel %vm629, %v628, %v626
    %vm632 = vcmp.lt.s32.totalorder %v58, 111
    %vm633 = vcmp.lt.s32.totalorder %v59, 111
    %v634 = vsel %vm632, %v630, 0.0
    %v635 = vsel %vm633, %v631, 0.0
    %636 = vst [vmem:[#allocation2 + $0x120] sm:$0xf] %v634
    %637 = vst [vmem:[#allocation2 + $0x128] sm:$0xf] %v635
    %638 = vrot.lane.b32.xlu0 %v30, 110
    %v639 = vpop.permute.xlu0 %638
    %640 = vrot.lane.b32.xlu0 %v32, 110
    %v641 = vpop.permute.xlu0 %640
    %vm642 = vcmp.lt.s32.totalorder %v34, 110
    %v643 = vsel %vm642, %v639, %v641
    %v644 = vsel %vm642, %v641, %v639
    %vm645 = vcmp.lt.s32.totalorder %v58, 110
    %vm646 = vcmp.lt.s32.totalorder %v59, 110
    %v647 = vsel %vm645, %v643, 0.0
    %v648 = vsel %vm646, %v644, 0.0
    %v651 = vrot.slane %v647, 4
    %v652 = vrot.slane %v648, 4
    %655 = vst [vmem:[#allocation2 + $0x120] sm:$0xf0] %v651
    %656 = vst [vmem:[#allocation2 + $0x128] sm:$0xf0] %v652
    %657 = vrot.lane.b32.xlu0 %v30, 109
    %v658 = vpop.permute.xlu0 %657
    %659 = vrot.lane.b32.xlu0 %v32, 109
    %v660 = vpop.permute.xlu0 %659
    %vm661 = vcmp.lt.s32.totalorder %v34, 109
    %v662 = vsel %vm661, %v658, %v660
    %v663 = vsel %vm661, %v660, %v658
    %vm664 = vcmp.lt.s32.totalorder %v58, 109
    %vm665 = vcmp.lt.s32.totalorder %v59, 109
    %v666 = vsel %vm664, %v662, 0.0
    %v667 = vsel %vm665, %v663, 0.0
    %668 = vst [vmem:[#allocation2 + $0x130] sm:$0xf] %v666
    %669 = vst [vmem:[#allocation2 + $0x138] sm:$0xf] %v667
    %vm670 = vcmp.gt.s32.totalorder %v58, 0
    %vm671 = vcmp.gt.s32.totalorder %v59, 0
    %v672 = vsel %vm670, %v354, %v30
    %v673 = vsel %vm671, %v353, %v32
    %v674 = vsel %vm376, %v374, %v30
    %v675 = vsel %vm377, %v375, %v32
    %v676 = vmax.f32 %v672, %v30
    %v677 = vmax.f32 %v673, %v32
    %v678 = vmax.f32 %v676, %v674
    %v679 = vmax.f32 %v677, %v675
    %v682 = vrot.slane %v678, 4
    %v683 = vrot.slane %v679, 4
    %686 = vst [vmem:[#allocation2 + $0x130] sm:$0xf0] %v682
    %687 = vst [vmem:[#allocation2 + $0x138] sm:$0xf0] %v683
    %v688 = vld [vmem:[#allocation3] sm:$0xff]
    %v689 = vld [vmem:[#allocation3 + $0x8] sm:$0xff]
    %v690 = vld [vmem:[#allocation3 + $0x10] sm:$0xff]
    %v691 = vld [vmem:[#allocation3 + $0x18] sm:$0xff]
    %v692 = vld [vmem:[#allocation3 + $0x20] sm:$0xff]
    %v693 = vld [vmem:[#allocation3 + $0x28] sm:$0xff]
    %v694 = vld [vmem:[#allocation3 + $0x30] sm:$0xff]
    %v695 = vld [vmem:[#allocation3 + $0x38] sm:$0xff]
    %v696 = vld [vmem:[#allocation2] sm:$0xff]
    %v697 = vld [vmem:[#allocation2 + $0x8] sm:$0xff]
    %v698 = vld [vmem:[#allocation2 + $0x10] sm:$0xff]
    %v699 = vld [vmem:[#allocation2 + $0x18] sm:$0xff]
    %v700 = vld [vmem:[#allocation2 + $0x20] sm:$0xff]
    %v701 = vld [vmem:[#allocation2 + $0x28] sm:$0xff]
    %v702 = vld [vmem:[#allocation2 + $0x30] sm:$0xff]
    %v703 = vld [vmem:[#allocation2 + $0x38] sm:$0xff]
    %v704 = vld [vmem:[#allocation2 + $0x40] sm:$0xff]
    %v705 = vld [vmem:[#allocation2 + $0x48] sm:$0xff]
    %v706 = vld [vmem:[#allocation2 + $0x50] sm:$0xff]
    %v707 = vld [vmem:[#allocation2 + $0x58] sm:$0xff]
    %v708 = vld [vmem:[#allocation2 + $0x60] sm:$0xff]
    %v709 = vld [vmem:[#allocation2 + $0x68] sm:$0xff]
    %v710 = vld [vmem:[#allocation2 + $0x70] sm:$0xff]
    %v711 = vld [vmem:[#allocation2 + $0x78] sm:$0xff]
    %v712 = vld [vmem:[#allocation2 + $0x80] sm:$0xff]
    %v713 = vld [vmem:[#allocation2 + $0x88] sm:$0xff]
    %v714 = vld [vmem:[#allocation2 + $0x90] sm:$0xff]
    %v715 = vld [vmem:[#allocation2 + $0x98] sm:$0xff]
    %v716 = vld [vmem:[#allocation2 + $0xa0] sm:$0xff]
    %v717 = vld [vmem:[#allocation2 + $0xa8] sm:$0xff]
    %v718 = vld [vmem:[#allocation2 + $0xb0] sm:$0xff]
    %v719 = vld [vmem:[#allocation2 + $0xb8] sm:$0xff]
    %v720 = vld [vmem:[#allocation2 + $0xc0] sm:$0xff]
    %v721 = vld [vmem:[#allocation2 + $0xc8] sm:$0xff]
    %v722 = vld [vmem:[#allocation2 + $0xd0] sm:$0xff]
    %v723 = vld [vmem:[#allocation2 + $0xd8] sm:$0xff]
    %v724 = vld [vmem:[#allocation2 + $0xe0] sm:$0xff]
    %v725 = vld [vmem:[#allocation2 + $0xe8] sm:$0xff]
    %v726 = vld [vmem:[#allocation2 + $0xf0] sm:$0xff]
    %v727 = vld [vmem:[#allocation2 + $0xf8] sm:$0xff]
    %v728 = vld [vmem:[#allocation2 + $0x100] sm:$0xff]
    %v729 = vld [vmem:[#allocation2 + $0x108] sm:$0xff]
    %v730 = vld [vmem:[#allocation2 + $0x110] sm:$0xff]
    %v731 = vld [vmem:[#allocation2 + $0x118] sm:$0xff]
    %v732 = vld [vmem:[#allocation2 + $0x120] sm:$0xff]
    %v733 = vld [vmem:[#allocation2 + $0x128] sm:$0xff]
    %v734 = vld [vmem:[#allocation2 + $0x130] sm:$0xff]
    %v735 = vld [vmem:[#allocation2 + $0x138] sm:$0xff]
    %vm736 = vcmask 261120
    %v738 = vsel %vm736, %v689, 0
    %v741 = vsel %vm736, %v691, 0
    %v744 = vsel %vm736, %v693, 0
    %v747 = vsel %vm736, %v695, 0
    %749 = vmatpush.msra.mxu0 %v726
    %750 = vmatpush.msra.mxu0 %v724
    %751 = vmatpush.msra.mxu0 %v722
    %752 = vmatpush.msra.mxu0 %v720
    %753 = vmatpush.msra.mxu0 %v718
    %754 = vmatpush.msra.mxu0 %v716
    %755 = vmatpush.msra.mxu0 %v714
    %756 = vmatpush.msra.mxu0 %v712
    %757 = vmatpush.msra.mxu0 %v710
    %758 = vmatpush.msra.mxu0 %v708
    %759 = vmatpush.msra.mxu0 %v706
    %760 = vmatpush.msra.mxu0 %v704
    %761 = vmatpush.msra.mxu0 %v702
    %762 = vmatpush.msra.mxu0 %v700
    %763 = vmatpush.msra.mxu0 %v698
    %764 = vmatpush.msra.mxu0 %v696
    %765 = vmatmul.f32.gmra.mxu0 %v688
    %v766 = vpop.f32.mrf.mxu0
    %v767 = vadd.f32 0.0, %v766
    %768 = vmatmul.f32.gmra.mxu0 %v690
    %v769 = vpop.f32.mrf.mxu0
    %v770 = vadd.f32 0.0, %v769
    %771 = vmatmul.f32.gmra.mxu0 %v692
    %v772 = vpop.f32.mrf.mxu0
    %v773 = vadd.f32 0.0, %v772
    %774 = vmatmul.f32.gmra.mxu0 %v694
    %v775 = vpop.f32.mrf.mxu0
    %v776 = vadd.f32 0.0, %v775
    %777 = vdwg.mxu0
    %778 = vmatpush.msra.mxu0 0.0
    %779 = vmatpush.msra.mxu0 0.0
    %780 = vmatpush.msra.mxu0 0.0
    %781 = vmatpush.msra.mxu0 0.0
    %782 = vmatpush.msra.mxu0 0.0
    %783 = vmatpush.msra.mxu0 0.0
    %784 = vmatpush.msra.mxu0 0.0
    %785 = vmatpush.msra.mxu0 0.0
    %786 = vmatpush.msra.mxu0 0.0
    %787 = vmatpush.msra.mxu0 0.0
    %788 = vmatpush.msra.mxu0 0.0
    %789 = vmatpush.msra.mxu0 0.0
    %790 = vmatpush.msra.mxu0 %v734
    %791 = vmatpush.msra.mxu0 %v732
    %792 = vmatpush.msra.mxu0 %v730
    %793 = vmatpush.msra.mxu0 %v728
    %794 = vmatmul.f32.gmra.mxu0 %v738
    %v795 = vpop.f32.mrf.mxu0
    %v796 = vadd.f32 %v767, %v795
    %797 = vmatmul.f32.gmra.mxu0 %v741
    %v798 = vpop.f32.mrf.mxu0
    %v799 = vadd.f32 %v770, %v798
    %800 = vmatmul.f32.gmra.mxu0 %v744
    %v801 = vpop.f32.mrf.mxu0
    %v802 = vadd.f32 %v773, %v801
    %803 = vmatmul.f32.gmra.mxu0 %v747
    %v804 = vpop.f32.mrf.mxu0
    %v805 = vadd.f32 %v776, %v804
    %806 = vdwg.mxu0
    %807 = vmatpush.msra.mxu0 %v727
    %808 = vmatpush.msra.mxu0 %v725
    %809 = vmatpush.msra.mxu0 %v723
    %810 = vmatpush.msra.mxu0 %v721
    %811 = vmatpush.msra.mxu0 %v719
    %812 = vmatpush.msra.mxu0 %v717
    %813 = vmatpush.msra.mxu0 %v715
    %814 = vmatpush.msra.mxu0 %v713
    %815 = vmatpush.msra.mxu0 %v711
    %816 = vmatpush.msra.mxu0 %v709
    %817 = vmatpush.msra.mxu0 %v707
    %818 = vmatpush.msra.mxu0 %v705
    %819 = vmatpush.msra.mxu0 %v703
    %820 = vmatpush.msra.mxu0 %v701
    %821 = vmatpush.msra.mxu0 %v699
    %822 = vmatpush.msra.mxu0 %v697
    %823 = vmatmul.f32.gmra.mxu0 %v688
    %v824 = vpop.f32.mrf.mxu0
    %v825 = vadd.f32 0.0, %v824
    %826 = vmatmul.f32.gmra.mxu0 %v690
    %v827 = vpop.f32.mrf.mxu0
    %v828 = vadd.f32 0.0, %v827
    %829 = vmatmul.f32.gmra.mxu0 %v692
    %v830 = vpop.f32.mrf.mxu0
    %v831 = vadd.f32 0.0, %v830
    %832 = vmatmul.f32.gmra.mxu0 %v694
    %v833 = vpop.f32.mrf.mxu0
    %v834 = vadd.f32 0.0, %v833
    %835 = vdwg.mxu0
    %836 = vmatpush.msra.mxu0 0.0
    %837 = vmatpush.msra.mxu0 0.0
    %838 = vmatpush.msra.mxu0 0.0
    %839 = vmatpush.msra.mxu0 0.0
    %840 = vmatpush.msra.mxu0 0.0
    %841 = vmatpush.msra.mxu0 0.0
    %842 = vmatpush.msra.mxu0 0.0
    %843 = vmatpush.msra.mxu0 0.0
    %844 = vmatpush.msra.mxu0 0.0
    %845 = vmatpush.msra.mxu0 0.0
    %846 = vmatpush.msra.mxu0 0.0
    %847 = vmatpush.msra.mxu0 0.0
    %848 = vmatpush.msra.mxu0 %v735
    %849 = vmatpush.msra.mxu0 %v733
    %850 = vmatpush.msra.mxu0 %v731
    %851 = vmatpush.msra.mxu0 %v729
    %852 = vmatmul.f32.gmra.mxu0 %v738
    %v853 = vpop.f32.mrf.mxu0
    %v854 = vadd.f32 %v825, %v853
    %855 = vmatmul.f32.gmra.mxu0 %v741
    %v856 = vpop.f32.mrf.mxu0
    %v857 = vadd.f32 %v828, %v856
    %858 = vmatmul.f32.gmra.mxu0 %v744
    %v859 = vpop.f32.mrf.mxu0
    %v860 = vadd.f32 %v831, %v859
    %861 = vmatmul.f32.gmra.mxu0 %v747
    %v862 = vpop.f32.mrf.mxu0
    %v863 = vadd.f32 %v834, %v862
    %864 = vdwg.mxu0
    %v865 = vadd.f32 %v796, %v854
    %866 = vadd.xlane.f32.xlu0 %v865
    %v867 = vpop.xlane.xlu0 %866
    %v868 = vadd.f32 %v799, %v857
    %869 = vadd.xlane.f32.xlu0 %v868
    %v870 = vpop.xlane.xlu0 %869
    %v871 = vadd.f32 %v802, %v860
    %872 = vadd.xlane.f32.xlu0 %v871
    %v873 = vpop.xlane.xlu0 %872
    %v874 = vadd.f32 %v805, %v863
    %875 = vadd.xlane.f32.xlu0 %v874
    %v876 = vpop.xlane.xlu0 %875
    %v877 = vmul.f32 %v867, 0.00390625
    %v878 = vmul.f32 %v870, 0.00390625
    %v879 = vmul.f32 %v873, 0.00390625
    %v880 = vmul.f32 %v876, 0.00390625
    %v881 = vsub.f32 %v796, %v877
    %v882 = vsub.f32 %v854, %v877
    %v883 = vsub.f32 %v799, %v878
    %v884 = vsub.f32 %v857, %v878
    %v885 = vsub.f32 %v802, %v879
    %v886 = vsub.f32 %v860, %v879
    %v887 = vsub.f32 %v805, %v880
    %v888 = vsub.f32 %v863, %v880
    %v889 = vmul.f32 %v881, %v881
    %v890 = vmul.f32 %v882, %v882
    %v891 = vmul.f32 %v883, %v883
    %v892 = vmul.f32 %v884, %v884
    %v893 = vmul.f32 %v885, %v885
    %v894 = vmul.f32 %v886, %v886
    %v895 = vmul.f32 %v887, %v887
    %v896 = vmul.f32 %v888, %v888
    %v897 = vadd.f32 %v889, %v890
    %898 = vadd.xlane.f32.xlu0 %v897
    %v899 = vpop.xlane.xlu0 %898
    %v900 = vadd.f32 %v891, %v892
    %901 = vadd.xlane.f32.xlu0 %v900
    %v902 = vpop.xlane.xlu0 %901
    %v903 = vadd.f32 %v893, %v894
    %904 = vadd.xlane.f32.xlu0 %v903
    %v905 = vpop.xlane.xlu0 %904
    %v906 = vadd.f32 %v895, %v896
    %907 = vadd.xlane.f32.xlu0 %v906
    %v908 = vpop.xlane.xlu0 %907
    %v909 = vmul.f32 %v899, 0.00390625
    %v910 = vmul.f32 %v902, 0.00390625
    %v911 = vmul.f32 %v905, 0.00390625
    %v912 = vmul.f32 %v908, 0.00390625
    %v913 = vadd.f32 %v909, 1e-05
    %v914 = vadd.f32 %v910, 1e-05
    %v915 = vadd.f32 %v911, 1e-05
    %v916 = vadd.f32 %v912, 1e-05
    %v917 = vrsqrt.pop %v913
    %v918 = vmul.f32 %v917, %v913
    %v919 = vmul.f32 %v918, %v917
    %v920 = vmul.f32 0.5, %v919
    %v921 = vsub.f32 1.5, %v920
    %v922 = vmul.f32 %v917, %v921
    %vm923 = vweird.f32 %v913
    %vm924 = vweird.f32 %v917
    %vm925 = vmor %vm923, %vm924
    %v926 = vsel %vm925, %v917, %v922
    %v927 = vrsqrt.pop %v914
    %v928 = vmul.f32 %v927, %v914
    %v929 = vmul.f32 %v928, %v927
    %v930 = vmul.f32 0.5, %v929
    %v931 = vsub.f32 1.5, %v930
    %v932 = vmul.f32 %v927, %v931
    %vm933 = vweird.f32 %v914
    %vm934 = vweird.f32 %v927
    %vm935 = vmor %vm933, %vm934
    %v936 = vsel %vm935, %v927, %v932
    %v937 = vrsqrt.pop %v915
    %v938 = vmul.f32 %v937, %v915
    %v939 = vmul.f32 %v938, %v937
    %v940 = vmul.f32 0.5, %v939
    %v941 = vsub.f32 1.5, %v940
    %v942 = vmul.f32 %v937, %v941
    %vm943 = vweird.f32 %v915
    %vm944 = vweird.f32 %v937
    %vm945 = vmor %vm943, %vm944
    %v946 = vsel %vm945, %v937, %v942
    %v947 = vrsqrt.pop %v916
    %v948 = vmul.f32 %v947, %v916
    %v949 = vmul.f32 %v948, %v947
    %v950 = vmul.f32 0.5, %v949
    %v951 = vsub.f32 1.5, %v950
    %v952 = vmul.f32 %v947, %v951
    %vm953 = vweird.f32 %v916
    %vm954 = vweird.f32 %v947
    %vm955 = vmor %vm953, %vm954
    %v956 = vsel %vm955, %v947, %v952
    %v957 = vld [vmem:[%s2] sm:$0xff]
    %v958 = vld [vmem:[%s2 + $0x8] sm:$0xff]
    %v959 = vld [vmem:[%s2 + $0x10] sm:$0xff]
    %v960 = vld [vmem:[%s2 + $0x18] sm:$0xff]
    %v961 = vmul.f32 %v957, %v926
    %v962 = vmul.f32 %v958, %v936
    %v963 = vmul.f32 %v959, %v946
    %v964 = vmul.f32 %v960, %v956
    %v965 = vmul.f32 %v877, %v961
    %v966 = vmul.f32 %v878, %v962
    %v967 = vmul.f32 %v879, %v963
    %v968 = vmul.f32 %v880, %v964
    %973 = vrot.lane.b32.xlu0 %v965, 1
    %v974 = vpop.permute.xlu0 %973
    %975 = vrot.lane.b32.xlu0 %v966, 1
    %v976 = vpop.permute.xlu0 %975
    %977 = vrot.lane.b32.xlu0 %v967, 1
    %v978 = vpop.permute.xlu0 %977
    %979 = vrot.lane.b32.xlu0 %v968, 1
    %v980 = vpop.permute.xlu0 %979
    %v985 = vsub.f32 %v957, %v974
    %v986 = vsub.f32 %v958, %v976
    %v987 = vsub.f32 %v959, %v978
    %v988 = vsub.f32 %v960, %v980
    %990 = vset.pattern.permute.xlu0 0
    %991 = vperm.xlu0 %990, %v961
    %v992 = vpop.permute.xlu0 %991
    %995 = vset.pattern.permute.xlu0 0
    %996 = vperm.xlu0 %995, %v962
    %v997 = vpop.permute.xlu0 %996
    %1000 = vset.pattern.permute.xlu0 0
    %1001 = vperm.xlu0 %1000, %v963
    %v1002 = vpop.permute.xlu0 %1001
    %1005 = vset.pattern.permute.xlu0 0
    %1006 = vperm.xlu0 %1005, %v964
    %v1007 = vpop.permute.xlu0 %1006
    %v1009 = vmul.f32 %v796, %v992
    %v1010 = vmul.f32 %v854, %v992
    %v1011 = vmul.f32 %v799, %v997
    %v1012 = vmul.f32 %v857, %v997
    %v1013 = vmul.f32 %v802, %v1002
    %v1014 = vmul.f32 %v860, %v1002
    %v1015 = vmul.f32 %v805, %v1007
    %v1016 = vmul.f32 %v863, %v1007
    %1018 = vset.pattern.permute.xlu0 1
    %1019 = vperm.xlu0 %1018, %v985
    %v1020 = vpop.permute.xlu0 %1019
    %1023 = vset.pattern.permute.xlu0 1
    %1024 = vperm.xlu0 %1023, %v986
    %v1025 = vpop.permute.xlu0 %1024
    %1028 = vset.pattern.permute.xlu0 1
    %1029 = vperm.xlu0 %1028, %v987
    %v1030 = vpop.permute.xlu0 %1029
    %1033 = vset.pattern.permute.xlu0 1
    %1034 = vperm.xlu0 %1033, %v988
    %v1035 = vpop.permute.xlu0 %1034
    %v1037 = vadd.f32 %v1009, %v1020
    %v1038 = vadd.f32 %v1010, %v1020
    %v1039 = vadd.f32 %v1011, %v1025
    %v1040 = vadd.f32 %v1012, %v1025
    %v1041 = vadd.f32 %v1013, %v1030
    %v1042 = vadd.f32 %v1014, %v1030
    %v1043 = vadd.f32 %v1015, %v1035
    %v1044 = vadd.f32 %v1016, %v1035
    %v1045 = vmax.f32 %v1037, 0.0
    %v1046 = vmax.f32 %v1038, 0.0
    %v1047 = vmax.f32 %v1039, 0.0
    %v1048 = vmax.f32 %v1040, 0.0
    %v1049 = vmax.f32 %v1041, 0.0
    %v1050 = vmax.f32 %v1042, 0.0
    %v1051 = vmax.f32 %v1043, 0.0
    %v1052 = vmax.f32 %v1044, 0.0
    %1053 = vst [vmem:[%s3] sm:$0xff] %v1045
    %1054 = vst [vmem:[%s3 + $0x8] sm:$0xff] %v1046
    %1055 = vst [vmem:[%s3 + $0x10] sm:$0xff] %v1047
    %1056 = vst [vmem:[%s3 + $0x18] sm:$0xff] %v1048
    %1057 = vst [vmem:[%s3 + $0x20] sm:$0xff] %v1049
    %1058 = vst [vmem:[%s3 + $0x28] sm:$0xff] %v1050
    %1059 = vst [vmem:[%s3 + $0x30] sm:$0xff] %v1051
    %1060 = vst [vmem:[%s3 + $0x38] sm:$0xff] %v1052
    // Predicated region
    $region18: #{inception_forward.1} parent=1 // pred_check
      _
    $region19: #{inception_forward.1} parent=1 // pred_check_branch
      %1062 = sbr.rel (0) target = $region21
    $region20: #{inception_forward.1} parent=1 // pred_region
      _
    $region21: #{inception_forward.1} parent=1 // pred_fallthru
      _
    // Predicated region
    $region22: #{inception_forward.1} parent=1 // pred_check
      _
    $region23: #{inception_forward.1} parent=1 // pred_check_branch
      %1064 = sbr.rel (0) target = $region25
    $region24: #{inception_forward.1} parent=1 // pred_region
      _
    $region25: #{inception_forward.1} parent=1 // pred_fallthru
      _
    %1065 = vsyncpa [#allocation4], 1

</llo_original>
